<compile_context>
chip_gen: v7x
topology: tpu7x:2x2x1
jax: 0.10.0
libtpu: 0.0.40
codegen_flags: <defaults>
</compile_context>

<pallas_src>
import functools

import jax
import jax.numpy as jnp
from jax.experimental import pallas as pl
from jax.experimental.pallas import tpu as pltpu


# ----------------------------------------------------------------------------
# Pallas kernel: one grid step == one mask group x one batch tile.
# ----------------------------------------------------------------------------
def _predictor_kernel(nc, x_ref, idx_ref, pos_ref, mtok_ref,
                      w1_ref, b1_ref, w2_ref, b2_ref, out_ref):
    """
    x_ref    : [Bt, Nc+Nt, D]   bf16  context & target tokens (concat on tokens)
    idx_ref  : [Bt*(Nc+Nt), 1]  int32 pos-table row per token (ctxt then tgt)
    pos_ref  : [N_POS, H]       bf16  positional table (grid-invariant)
    mtok_ref : [1, H]           f32   mask token of this mask group (grid-indexed)
    w1/b1/w2/b2                       params (w* bf16, b* f32)
    out_ref  : [Bt, Nt, D]      f32
    """
    bt, n_tok, d = x_ref.shape
    nt = n_tok - nc
    n_pos, h = pos_ref.shape
    m = bt * n_tok

    # --- shared embedding: ONE MXU push for context AND target tokens -------
    x = x_ref[...].reshape(m, d)                                       # bf16 [M, D]
    e = jnp.dot(x, w1_ref[...], preferred_element_type=jnp.float32)    # f32  [M, H]

    # --- in-kernel positional gather: one-hot(idx) @ pos_table (exact) ------
    idx = idx_ref[...]                                                 # i32 [M, 1]
    lane = jax.lax.broadcasted_iota(jnp.int32, (m, n_pos), 1)          # i32 [M, P]
    onehot = jnp.where(idx == lane, 1.0, 0.0).astype(pos_ref.dtype)    # bf16 [M, P]
    pos = jnp.dot(onehot, pos_ref[...],
                  preferred_element_type=jnp.float32)                  # f32 [M, H]

    e = e.reshape(bt, n_tok, h)
    pos = pos.reshape(bt, n_tok, h)

    b1 = b1_ref[...].astype(jnp.float32)                               # [1, H]
    tgt_bias = mtok_ref[...].astype(jnp.float32) + b1                  # hoisted [1, H]

    # --- context branch: +bias +pos -> GELU -> per-sample mean pool ---------
    hc = jax.nn.gelu(e[:, :nc, :] + pos[:, :nc, :] + b1)               # [Bt, Nc, H]
    pooled = jnp.mean(hc, axis=1, keepdims=True)                       # [Bt, 1, H]

    # --- target branch: pooled ctxt + pos + (mask token + b1) + 0.5*embed ---
    t = jax.nn.gelu(pooled + pos[:, nc:, :] + tgt_bias
                    + 0.5 * e[:, nc:, :])                              # [Bt, Nt, H]

    # --- output projection, lane-dense store ---------------------------------
    t2 = t.reshape(bt * nt, h).astype(w2_ref.dtype)                    # bf16
    out = jnp.dot(t2, w2_ref[...], preferred_element_type=jnp.float32)
    out = out + b2_ref[...].astype(jnp.float32)                        # [Bt*Nt, D]
    out_ref[...] = out.reshape(bt, nt, d).astype(out_ref.dtype)


def _pick_batch_tile(B, Nc, Nt, D, vmem_budget=8 << 20):
    """Largest batch tile whose (double-buffered) batch-sized blocks fit a
    conservative VMEM budget.  v7x only has 64 MiB physical / 32 MiB scoped
    VMEM, so stay well under it; grid-invariant weight blocks are tiny."""
    n_tok = Nc + Nt
    for bt in range(B, 0, -1):
        if B % bt:
            continue
        if (bt * n_tok) % 8 and bt != B:      # keep index block sublane-aligned
            continue
        blk = bt * n_tok * D * 2              # x    (bf16)
        blk += bt * n_tok * 128 * 4           # idx  (int32, lane-padded)
        blk += bt * Nt * D * 4                # out  (f32)
        if 2 * blk <= vmem_budget:            # x2 for double buffering
            return bt
    return 1


# ----------------------------------------------------------------------------
# Fused backbone: zi [G,B,Nc,D], hi [G,B,Nt,D], mc [G,B,Nc], mt [G,B,Nt]
#                 -> out [G,B,Nt,D] in one pallas_call.
# ----------------------------------------------------------------------------
def _predictor_backbone_pallas(zi, hi, mc, mt, mask_toks, params, pos_table):
    w1, b1, w2, b2 = params
    G, B, Nc, D = zi.shape
    Nt = hi.shape[2]
    H = w1.shape[1]
    n_pos = pos_table.shape[0]
    n_tok = Nc + Nt

    Bt = _pick_batch_tile(B, Nc, Nt, D)
    grid = (G, B // Bt)

    # Host-side glue: concat ctxt/tgt tokens + indices, cast MXU operands bf16.
    x = jnp.concatenate([zi, hi], axis=2).astype(jnp.bfloat16)          # [G,B,T,D]
    idx = jnp.concatenate([mc, mt], axis=2).astype(jnp.int32)
    idx = idx.reshape(G, B * n_tok, 1)                                  # [G,B*T,1]
    mtok = mask_toks.astype(jnp.float32).reshape(G, 1, H)               # [G,1,H]
    w1b = w1.astype(jnp.bfloat16)
    w2b = w2.astype(jnp.bfloat16)
    posb = pos_table.astype(jnp.bfloat16)

    grid_spec = pltpu.PrefetchScalarGridSpec(
        num_scalar_prefetch=0,
        grid=grid,
        in_specs=[
            pl.BlockSpec((None, Bt, n_tok, D), lambda g, b: (g, b, 0, 0)),   # x
            pl.BlockSpec((None, Bt * n_tok, 1), lambda g, b: (g, b, 0)),     # idx
            pl.BlockSpec((n_pos, H), lambda g, b: (0, 0)),                   # pos tbl
            pl.BlockSpec((None, 1, H), lambda g, b: (g, 0, 0)),              # mask tok
            pl.BlockSpec((D, H), lambda g, b: (0, 0)),                       # w1
            pl.BlockSpec((1, H), lambda g, b: (0, 0)),                       # b1
            pl.BlockSpec((H, D), lambda g, b: (0, 0)),                       # w2
            pl.BlockSpec((1, D), lambda g, b: (0, 0)),                       # b2
        ],
        out_specs=pl.BlockSpec((None, Bt, Nt, D), lambda g, b: (g, b, 0, 0)),
    )

    return pl.pallas_call(
        functools.partial(_predictor_kernel, Nc),
        out_shape=jax.ShapeDtypeStruct((G, B, Nt, D), zi.dtype),
        grid_spec=grid_spec,
        compiler_params=pltpu.CompilerParams(
            dimension_semantics=("parallel", "parallel")),
    )(x, idx, posb, mtok, w1b, b1, w2b, b2)


# ----------------------------------------------------------------------------
# Pure-JAX reference (same bf16 MXU operands / f32 elementwise math).
# ----------------------------------------------------------------------------
def _predictor_backbone_ref(zi, hi, mc, mt, mask_toks, params, pos_table):
    w1, b1, w2, b2 = params
    w1b = w1.astype(jnp.bfloat16)
    w2b = w2.astype(jnp.bfloat16)
    posb = pos_table.astype(jnp.bfloat16)
    pos_c = jnp.take(posb, mc, axis=0).astype(jnp.float32)              # [G,B,Nc,H]
    pos_t = jnp.take(posb, mt, axis=0).astype(jnp.float32)              # [G,B,Nt,H]
    e_c = jnp.einsum("gbnd,dh->gbnh", zi.astype(jnp.bfloat16), w1b,
                     preferred_element_type=jnp.float32)
    e_t = jnp.einsum("gbnd,dh->gbnh", hi.astype(jnp.bfloat16), w1b,
                     preferred_element_type=jnp.float32)
    h = jax.nn.gelu(e_c + b1 + pos_c)
    pooled = jnp.mean(h, axis=2, keepdims=True)                         # [G,B,1,H]
    mtok = mask_toks[:, None, None, :].astype(jnp.float32)              # [G,1,1,H]
    t = jax.nn.gelu(pooled + pos_t + mtok + b1 + 0.5 * e_t)
    out = jnp.einsum("gbth,hd->gbtd", t.astype(jnp.bfloat16), w2b,
                     preferred_element_type=jnp.float32) + b2
    return out.astype(zi.dtype)


# ----------------------------------------------------------------------------
# PredictorMultiMaskWrapper equivalent.
# ----------------------------------------------------------------------------
class PredictorMultiMaskWrapper:
    """Mirrors the PyTorch wrapper.  When all mask groups share shapes (the
    usual multi-mask setup), the Python loop is fused into a single
    pallas_call whose leading grid axis is the mask group; otherwise it falls
    back to one fused call per (ragged) group using the same kernel."""

    def __init__(self, params, pos_table, mask_tokens, backbone_fn):
        self.params = params
        self.pos_table = pos_table        # [N_POS, H]
        self.mask_tokens = mask_tokens    # [n_masks, H]; row i <-> mask_index i
        self.backbone_fn = backbone_fn

    def __call__(self, ctxt, tgt, masks_ctxt, masks_tgt):
        if type(ctxt) is not list:
            ctxt = [ctxt]
        if type(tgt) is not list:
            tgt = [tgt]
        if type(masks_ctxt) is not list:
            masks_ctxt = [masks_ctxt]
        if type(masks_tgt) is not list:
            masks_tgt = [masks_tgt]

        g = len(ctxt)
        uniform = (len({z.shape for z in ctxt}) == 1
                   and len({h.shape for h in tgt}) == 1
                   and len({m.shape for m in masks_ctxt}) == 1
                   and len({m.shape for m in masks_tgt}) == 1)

        if uniform:
            zi = jnp.stack(ctxt)            # [G, B, Nc, D]
            hi = jnp.stack(tgt)             # [G, B, Nt, D]
            mc = jnp.stack(masks_ctxt)      # [G, B, Nc]
            mt = jnp.stack(masks_tgt)       # [G, B, Nt]
            out = self.backbone_fn(zi, hi, mc, mt, self.mask_tokens[:g],
                                   self.params, self.pos_table)
            return [out[i] for i in range(g)]

        # Ragged mask groups: one fused (whole-batch) call per group.
        outs = []
        for i, (zi, hi, mc, mt) in enumerate(zip(ctxt, tgt, masks_ctxt, masks_tgt)):
            o = self.backbone_fn(zi[None], hi[None], mc[None], mt[None],
                                 self.mask_tokens[i:i + 1],
                                 self.params, self.pos_table)
            outs.append(o[0])
        return outs


if __name__ == "__main__":
    # Small but TPU-friendly shapes: D=H=128 (lane-dense), Bt*(Nc+Nt)=256 MXU rows.
    B, Nc, Nt, D, H = 8, 24, 8, 128, 128
    N_POS = 64          # positional-table size
    N_MASKS = 2         # number of mask groups in the multimask list

    key = jax.random.PRNGKey(0)
    keys = jax.random.split(key, 16)

    w1 = 0.1 * jax.random.normal(keys[0], (D, H), jnp.float32)
    b1 = 0.1 * jax.random.normal(keys[1], (1, H), jnp.float32)
    w2 = 0.1 * jax.random.normal(keys[2], (H, D), jnp.float32)
    b2 = 0.1 * jax.random.normal(keys[3], (1, D), jnp.float32)
    pos_table = 0.1 * jax.random.normal(keys[4], (N_POS, H), jnp.float32)
    mask_tokens = 0.1 * jax.random.normal(keys[5], (N_MASKS, H), jnp.float32)
    params = (w1, b1, w2, b2)

    ctxt = [jax.random.normal(keys[6 + i], (B, Nc, D), jnp.float32)
            for i in range(N_MASKS)]
    tgt = [jax.random.normal(keys[8 + i], (B, Nt, D), jnp.float32)
           for i in range(N_MASKS)]
    masks_ctxt = [jax.random.randint(keys[10 + i], (B, Nc), 0, N_POS, jnp.int32)
                  for i in range(N_MASKS)]
    masks_tgt = [jax.random.randint(keys[12 + i], (B, Nt), 0, N_POS, jnp.int32)
                 for i in range(N_MASKS)]

    wrapper = PredictorMultiMaskWrapper(params, pos_table, mask_tokens,
                                        _predictor_backbone_pallas)
    ref_wrapper = PredictorMultiMaskWrapper(params, pos_table, mask_tokens,
                                            _predictor_backbone_ref)

    outs = wrapper(ctxt, tgt, masks_ctxt, masks_tgt)
    outs = [jax.block_until_ready(o) for o in outs]

    refs = ref_wrapper(ctxt, tgt, masks_ctxt, masks_tgt)
    refs = [jax.block_until_ready(r) for r in refs]

    for o, r in zip(outs, refs):
        assert o.shape == (B, Nt, D)
        # bf16 MXU operands in both paths -> compare at bf16-level tolerance.
        assert jnp.allclose(o, r, atol=1e-2, rtol=1e-2), "mismatch vs reference"

    print("KERNEL_OK")
</pallas_src>

<mosaic_0001>
module attributes {stable_mosaic.version = 11 : i64} {
  func.func @_predictor_kernel(%arg0: i32, %arg1: i32, %arg2: memref<1x8x32x128xbf16, #tpu.memory_space<vmem>>, %arg3: memref<1x256x1xi32, #tpu.memory_space<vmem>>, %arg4: memref<64x128xbf16, #tpu.memory_space<vmem>>, %arg5: memref<1x1x128xf32, #tpu.memory_space<vmem>>, %arg6: memref<128x128xbf16, #tpu.memory_space<vmem>>, %arg7: memref<1x128xf32, #tpu.memory_space<vmem>>, %arg8: memref<128x128xbf16, #tpu.memory_space<vmem>>, %arg9: memref<1x128xf32, #tpu.memory_space<vmem>>, %arg10: memref<1x8x8x128xf32, #tpu.memory_space<vmem>>) attributes {dimension_semantics = [#tpu.dimension_semantics<parallel>, #tpu.dimension_semantics<parallel>], iteration_bounds = array<i64: 2, 1>, scalar_prefetch = 0 : i64, scratch_operands = 0 : i64, tpu.core_type = #tpu.core_type<tc>, window_params = [{transform_indices = @transform_0, window_bounds = array<i64: 1, 8, 32, 128>}, {transform_indices = @transform_1, window_bounds = array<i64: 1, 256, 1>}, {pipeline_mode = #tpu.pipeline_mode<synchronous>, transform_indices = @transform_2, window_bounds = array<i64: 64, 128>}, {transform_indices = @transform_3, window_bounds = array<i64: 1, 1, 128>}, {pipeline_mode = #tpu.pipeline_mode<synchronous>, transform_indices = @transform_4, window_bounds = array<i64: 128, 128>}, {pipeline_mode = #tpu.pipeline_mode<synchronous>, transform_indices = @transform_5, window_bounds = array<i64: 1, 128>}, {pipeline_mode = #tpu.pipeline_mode<synchronous>, transform_indices = @transform_6, window_bounds = array<i64: 128, 128>}, {pipeline_mode = #tpu.pipeline_mode<synchronous>, transform_indices = @transform_7, window_bounds = array<i64: 1, 128>}, {transform_indices = @transform_8, window_bounds = array<i64: 1, 8, 8, 128>}]} {
    %c0 = arith.constant 0 : index
    %c0_0 = arith.constant 0 : index
    %c0_1 = arith.constant 0 : index
    %c0_2 = arith.constant 0 : index
    %0 = vector.load %arg2[%c0, %c0_0, %c0_1, %c0_2] : memref<1x8x32x128xbf16, #tpu.memory_space<vmem>>, vector<1x8x32x128xbf16>
    %1 = vector.shape_cast %0 : vector<1x8x32x128xbf16> to vector<8x32x128xbf16>
    %2 = vector.shape_cast %1 : vector<8x32x128xbf16> to vector<256x128xbf16>
    %c0_3 = arith.constant 0 : index
    %c0_4 = arith.constant 0 : index
    %3 = vector.load %arg6[%c0_3, %c0_4] : memref<128x128xbf16, #tpu.memory_space<vmem>>, vector<128x128xbf16>
    %cst = arith.constant dense<0.000000e+00> : vector<256x128xf32>
    %4 = tpu.matmul %2, %3, %cst {dimension_numbers = #tpu.dot_dimension_numbers<[1], [0], [0], [1], [0, 0, 1, 1], [], []>} : vector<256x128xbf16>, vector<128x128xbf16>, vector<256x128xf32> -> vector<256x128xf32>
    %c0_5 = arith.constant 0 : index
    %c0_6 = arith.constant 0 : index
    %c0_7 = arith.constant 0 : index
    %5 = vector.load %arg3[%c0_5, %c0_6, %c0_7] : memref<1x256x1xi32, #tpu.memory_space<vmem>>, vector<1x256x1xi32>
    %6 = vector.shape_cast %5 : vector<1x256x1xi32> to vector<256x1xi32>
    %7 = tpu.iota {dimensions = array<i32: 1>} : vector<256x64xi32>
    %8 = vector.broadcast %6 : vector<256x1xi32> to vector<256x64xi32>
    %9 = arith.cmpi eq, %8, %7 : vector<256x64xi32>
    %cst_8 = arith.constant 1.000000e+00 : f32
    %cst_9 = arith.constant 0.000000e+00 : f32
    %10 = vector.broadcast %cst_8 : f32 to vector<256x64xf32>
    %11 = vector.broadcast %cst_9 : f32 to vector<256x64xf32>
    %12 = arith.select %9, %10, %11 : vector<256x64xi1>, vector<256x64xf32>
    %13 = arith.truncf %12 : vector<256x64xf32> to vector<256x64xbf16>
    %c0_10 = arith.constant 0 : index
    %c0_11 = arith.constant 0 : index
    %14 = vector.load %arg4[%c0_10, %c0_11] : memref<64x128xbf16, #tpu.memory_space<vmem>>, vector<64x128xbf16>
    %cst_12 = arith.constant dense<0.000000e+00> : vector<256x128xf32>
    %15 = tpu.matmul %13, %14, %cst_12 {dimension_numbers = #tpu.dot_dimension_numbers<[1], [0], [0], [1], [0, 0, 1, 1], [], []>} : vector<256x64xbf16>, vector<64x128xbf16>, vector<256x128xf32> -> vector<256x128xf32>
    %16 = vector.shape_cast %4 : vector<256x128xf32> to vector<8x32x128xf32>
    %17 = vector.shape_cast %15 : vector<256x128xf32> to vector<8x32x128xf32>
    %c0_13 = arith.constant 0 : index
    %c0_14 = arith.constant 0 : index
    %18 = vector.load %arg7[%c0_13, %c0_14] : memref<1x128xf32, #tpu.memory_space<vmem>>, vector<1x128xf32>
    %c0_15 = arith.constant 0 : index
    %c0_16 = arith.constant 0 : index
    %c0_17 = arith.constant 0 : index
    %19 = vector.load %arg5[%c0_15, %c0_16, %c0_17] : memref<1x1x128xf32, #tpu.memory_space<vmem>>, vector<1x1x128xf32>
    %20 = vector.shape_cast %19 : vector<1x1x128xf32> to vector<1x128xf32>
    %21 = arith.addf %20, %18 : vector<1x128xf32>
    %22 = vector.extract_strided_slice %16 {offsets = [0, 0, 0], sizes = [8, 24, 128], strides = [1, 1, 1]} : vector<8x32x128xf32> to vector<8x24x128xf32>
    %23 = vector.extract_strided_slice %17 {offsets = [0, 0, 0], sizes = [8, 24, 128], strides = [1, 1, 1]} : vector<8x32x128xf32> to vector<8x24x128xf32>
    %24 = arith.addf %22, %23 : vector<8x24x128xf32>
    %25 = vector.shape_cast %18 : vector<1x128xf32> to vector<1x1x128xf32>
    %26 = vector.broadcast %25 : vector<1x1x128xf32> to vector<8x24x128xf32>
    %27 = arith.addf %24, %26 : vector<8x24x128xf32>
    %28 = arith.mulf %27, %27 : vector<8x24x128xf32>
    %29 = arith.mulf %27, %28 : vector<8x24x128xf32>
    %cst_18 = arith.constant 4.471500e-02 : f32
    %30 = vector.broadcast %cst_18 : f32 to vector<8x24x128xf32>
    %31 = arith.mulf %30, %29 : vector<8x24x128xf32>
    %32 = arith.addf %27, %31 : vector<8x24x128xf32>
    %cst_19 = arith.constant 0.797884583 : f32
    %33 = vector.broadcast %cst_19 : f32 to vector<8x24x128xf32>
    %34 = arith.mulf %33, %32 : vector<8x24x128xf32>
    %35 = math.tanh %34 : vector<8x24x128xf32>
    %cst_20 = arith.constant 1.000000e+00 : f32
    %36 = vector.broadcast %cst_20 : f32 to vector<8x24x128xf32>
    %37 = arith.addf %36, %35 : vector<8x24x128xf32>
    %cst_21 = arith.constant 5.000000e-01 : f32
    %38 = vector.broadcast %cst_21 : f32 to vector<8x24x128xf32>
    %39 = arith.mulf %38, %37 : vector<8x24x128xf32>
    %40 = arith.mulf %27, %39 : vector<8x24x128xf32>
    %cst_22 = arith.constant dense<0.000000e+00> : vector<8x128xf32>
    %41 = vector.multi_reduction <add>, %40, %cst_22 [1] : vector<8x24x128xf32> to vector<8x128xf32>
    %42 = vector.shape_cast %41 : vector<8x128xf32> to vector<8x1x128xf32>
    %cst_23 = arith.constant 2.400000e+01 : f32
    %43 = vector.broadcast %cst_23 : f32 to vector<8x1x128xf32>
    %44 = arith.divf %42, %43 : vector<8x1x128xf32>
    %45 = vector.extract_strided_slice %17 {offsets = [0, 24, 0], sizes = [8, 8, 128], strides = [1, 1, 1]} : vector<8x32x128xf32> to vector<8x8x128xf32>
    %46 = vector.broadcast %44 : vector<8x1x128xf32> to vector<8x8x128xf32>
    %47 = arith.addf %46, %45 : vector<8x8x128xf32>
    %48 = vector.shape_cast %21 : vector<1x128xf32> to vector<1x1x128xf32>
    %49 = vector.broadcast %48 : vector<1x1x128xf32> to vector<8x8x128xf32>
    %50 = arith.addf %47, %49 : vector<8x8x128xf32>
    %51 = vector.extract_strided_slice %16 {offsets = [0, 24, 0], sizes = [8, 8, 128], strides = [1, 1, 1]} : vector<8x32x128xf32> to vector<8x8x128xf32>
    %cst_24 = arith.constant 5.000000e-01 : f32
    %52 = vector.broadcast %cst_24 : f32 to vector<8x8x128xf32>
    %53 = arith.mulf %52, %51 : vector<8x8x128xf32>
    %54 = arith.addf %50, %53 : vector<8x8x128xf32>
    %55 = arith.mulf %54, %54 : vector<8x8x128xf32>
    %56 = arith.mulf %54, %55 : vector<8x8x128xf32>
    %cst_25 = arith.constant 4.471500e-02 : f32
    %57 = vector.broadcast %cst_25 : f32 to vector<8x8x128xf32>
    %58 = arith.mulf %57, %56 : vector<8x8x128xf32>
    %59 = arith.addf %54, %58 : vector<8x8x128xf32>
    %cst_26 = arith.constant 0.797884583 : f32
    %60 = vector.broadcast %cst_26 : f32 to vector<8x8x128xf32>
    %61 = arith.mulf %60, %59 : vector<8x8x128xf32>
    %62 = math.tanh %61 : vector<8x8x128xf32>
    %cst_27 = arith.constant 1.000000e+00 : f32
    %63 = vector.broadcast %cst_27 : f32 to vector<8x8x128xf32>
    %64 = arith.addf %63, %62 : vector<8x8x128xf32>
    %cst_28 = arith.constant 5.000000e-01 : f32
    %65 = vector.broadcast %cst_28 : f32 to vector<8x8x128xf32>
    %66 = arith.mulf %65, %64 : vector<8x8x128xf32>
    %67 = arith.mulf %54, %66 : vector<8x8x128xf32>
    %68 = vector.shape_cast %67 : vector<8x8x128xf32> to vector<64x128xf32>
    %69 = arith.truncf %68 : vector<64x128xf32> to vector<64x128xbf16>
    %c0_29 = arith.constant 0 : index
    %c0_30 = arith.constant 0 : index
    %70 = vector.load %arg8[%c0_29, %c0_30] : memref<128x128xbf16, #tpu.memory_space<vmem>>, vector<128x128xbf16>
    %cst_31 = arith.constant dense<0.000000e+00> : vector<64x128xf32>
    %71 = tpu.matmul %69, %70, %cst_31 {dimension_numbers = #tpu.dot_dimension_numbers<[1], [0], [0], [1], [0, 0, 1, 1], [], []>} : vector<64x128xbf16>, vector<128x128xbf16>, vector<64x128xf32> -> vector<64x128xf32>
    %c0_32 = arith.constant 0 : index
    %c0_33 = arith.constant 0 : index
    %72 = vector.load %arg9[%c0_32, %c0_33] : memref<1x128xf32, #tpu.memory_space<vmem>>, vector<1x128xf32>
    %73 = vector.broadcast %72 : vector<1x128xf32> to vector<64x128xf32>
    %74 = arith.addf %71, %73 : vector<64x128xf32>
    %75 = vector.shape_cast %74 : vector<64x128xf32> to vector<8x8x128xf32>
    %c0_34 = arith.constant 0 : index
    %c0_35 = arith.constant 0 : index
    %c0_36 = arith.constant 0 : index
    %c0_37 = arith.constant 0 : index
    %76 = vector.load %arg10[%c0_34, %c0_35, %c0_36, %c0_37] : memref<1x8x8x128xf32, #tpu.memory_space<vmem>>, vector<1x8x8x128xf32>
    %77 = vector.shape_cast %76 : vector<1x8x8x128xf32> to vector<8x8x128xf32>
    %78 = vector.shape_cast %75 : vector<8x8x128xf32> to vector<1x8x8x128xf32>
    tpu.vector_store %arg10[%c0_34, %c0_35, %c0_36, %c0_37], %78 {strides = array<i32>} : memref<1x8x8x128xf32, #tpu.memory_space<vmem>>, vector<1x8x8x128xf32>,
    return
  }
  func.func @transform_0(%arg0: i32, %arg1: i32) -> (i32, i32, i32, i32) {
    %c0_i32 = arith.constant 0 : i32
    %c0_i32_0 = arith.constant 0 : i32
    %c0_i32_1 = arith.constant 0 : i32
    return %arg0, %arg1, %c0_i32, %c0_i32_0 : i32, i32, i32, i32
  }
  func.func @transform_1(%arg0: i32, %arg1: i32) -> (i32, i32, i32) {
    %c0_i32 = arith.constant 0 : i32
    %c0_i32_0 = arith.constant 0 : i32
    return %arg0, %arg1, %c0_i32 : i32, i32, i32
  }
  func.func @transform_2(%arg0: i32, %arg1: i32) -> (i32, i32) {
    %c0_i32 = arith.constant 0 : i32
    %c0_i32_0 = arith.constant 0 : i32
    %c0_i32_1 = arith.constant 0 : i32
    return %c0_i32, %c0_i32_0 : i32, i32
  }
  func.func @transform_3(%arg0: i32, %arg1: i32) -> (i32, i32, i32) {
    %c0_i32 = arith.constant 0 : i32
    %c0_i32_0 = arith.constant 0 : i32
    %c0_i32_1 = arith.constant 0 : i32
    return %arg0, %c0_i32, %c0_i32_0 : i32, i32, i32
  }
  func.func @transform_4(%arg0: i32, %arg1: i32) -> (i32, i32) {
    %c0_i32 = arith.constant 0 : i32
    %c0_i32_0 = arith.constant 0 : i32
    %c0_i32_1 = arith.constant 0 : i32
    return %c0_i32, %c0_i32_0 : i32, i32
  }
  func.func @transform_5(%arg0: i32, %arg1: i32) -> (i32, i32) {
    %c0_i32 = arith.constant 0 : i32
    %c0_i32_0 = arith.constant 0 : i32
    %c0_i32_1 = arith.constant 0 : i32
    return %c0_i32, %c0_i32_0 : i32, i32
  }
  func.func @transform_6(%arg0: i32, %arg1: i32) -> (i32, i32) {
    %c0_i32 = arith.constant 0 : i32
    %c0_i32_0 = arith.constant 0 : i32
    %c0_i32_1 = arith.constant 0 : i32
    return %c0_i32, %c0_i32_0 : i32, i32
  }
  func.func @transform_7(%arg0: i32, %arg1: i32) -> (i32, i32) {
    %c0_i32 = arith.constant 0 : i32
    %c0_i32_0 = arith.constant 0 : i32
    %c0_i32_1 = arith.constant 0 : i32
    return %c0_i32, %c0_i32_0 : i32, i32
  }
  func.func @transform_8(%arg0: i32, %arg1: i32) -> (i32, i32, i32, i32) {
    %c0_i32 = arith.constant 0 : i32
    %c0_i32_0 = arith.constant 0 : i32
    %c0_i32_1 = arith.constant 0 : i32
    return %arg0, %arg1, %c0_i32, %c0_i32_0 : i32, i32, i32, i32
  }
}

</mosaic_0001>

<llo_original>
// kernel: tpu_custom_call.1
$region0: #{tpu_custom_call.1}
  #allocation0 [shape = 'u32[]', space=smem, size = 0x4, offset = 0x4, fixed_abs, tag = 'smem constant byte address 0x4 - core index']
  #allocation1 [shape = 'u32[144,128]{1,0:T(1,128)}', space=vmem, size = 0x12000, scoped, tag = 'internal scratch']
  %s0 = inlined_call_operand.vmem [shape: bf16[2,8,32,128], index: 0, kind: input, shape index: {}]
  %s1 = inlined_call_operand.vmem [shape: s32[2,256,1], index: 1, kind: input, shape index: {}]
  %s2 = inlined_call_operand.vmem [shape: bf16[64,128], index: 2, kind: input, shape index: {}]
  %s3 = inlined_call_operand.vmem [shape: f32[2,1,128], index: 3, kind: input, shape index: {}]
  %s4 = inlined_call_operand.vmem [shape: bf16[128,128], index: 4, kind: input, shape index: {}]
  %s5 = inlined_call_operand.vmem [shape: f32[1,128], index: 5, kind: input, shape index: {}]
  %s6 = inlined_call_operand.vmem [shape: bf16[128,128], index: 6, kind: input, shape index: {}]
  %s7 = inlined_call_operand.vmem [shape: f32[1,128], index: 7, kind: input, shape index: {}]
  %s8 = inlined_call_operand.hbm [shape: f32[2,8,8,128], index: 8, kind: output, shape index: {}]
  %s9 = sld [smem:[#allocation0]]
  $region65: #{tpu_custom_call.1} parent=0
    _
  %s11 = ssub.s32 1, %s9
  %s12 = scalar_select 0, %s11, %s9
  $region1: #{tpu_custom_call.1} parent=0
    #allocation2 [shape = 'u8[65536]{0}', space=vmem, size = 0x10000, scoped, tag = 'output window, operand 0']
    #allocation3 [shape = 's32[2]{0}', space=sflag, size = 0x8, scoped, tag = 'scoped memory for tpu_custom_call.1']
    %13 = vsyncpa [#allocation3], 0
    %s14 = scalar_lea.sflag [#allocation3], 1
    %15 = vsyncpa %s14, 0
    loop: start=0, step=1, limit=4
    $region2: #{tpu_custom_call.1} parent=1 // loop_pre_header
      _
    $region3: #{tpu_custom_call.1} parent=1 // loop_header
      %s17 = sphi 0, %s21
      %p18 = scmp.ge.s32.totalorder %s17, 4
      %s24 = sphi 0, %s36
      %s25 = sphi 0, %s32
      %s26 = sphi 0, %s24
      %s27 = sphi 0, %s25
      %s28 = sphi 0, %s26
      %s29 = sphi 0, %s27
      %s41 = sphi 0, %s43
      %s44 = sphi 0, %s41
      %s45 = sphi 0, %s44
      %s61 = sphi 0, %s45
      %s69 = sphi 0, %s71
      %s72 = sphi 0, %s69
      %s73 = sphi 0, %s72
      %s89 = sphi 0, %s73
      %s93 = sphi 0, %s93
      %s95 = sphi 0, %s93
      %s96 = sphi 0, %s95
      %s110 = sphi 0, %s96
      %s116 = sphi 0, %s118
      %s119 = sphi 0, %s116
      %s120 = sphi 0, %s119
      %s136 = sphi 0, %s120
      %s140 = sphi 0, %s140
      %s142 = sphi 0, %s140
      %s143 = sphi 0, %s142
      %s157 = sphi 0, %s143
      %s161 = sphi 0, %s161
      %s163 = sphi 0, %s161
      %s164 = sphi 0, %s163
      %s178 = sphi 0, %s164
      %s182 = sphi 0, %s182
      %s184 = sphi 0, %s182
      %s185 = sphi 0, %s184
      %s199 = sphi 0, %s185
      %s203 = sphi 0, %s203
      %s205 = sphi 0, %s203
      %s206 = sphi 0, %s205
      %s220 = sphi 0, %s206
      %s228 = sphi 0, %s230
      %s231 = sphi 0, %s228
      %s232 = sphi 0, %s231
      %s248 = sphi 0, %s232
    $region4: #{tpu_custom_call.1} parent=1 // loop_header_branch
      %20 = sbr.rel (%p18) target = $region8
    $region5: #{tpu_custom_call.1} parent=1 // loop_body
      %s22 = ssub.s32 %s17, 1
      %s23 = ssub.s32 %s17, 2
      %s30 = sadd.s32 1, %s25
      %p31 = scmp.ge.s32.totalorder %s30, 1
      %s32 = scalar_select %p31, 0, %s30
      %s33 = sadd.s32 1, %s24
      %s34 = scalar_select %p31, %s33, %s24
      %p35 = scmp.ge.s32.totalorder %s34, 2
      %s36 = scalar_select %p35, 0, %s34
      %s37 = ssub.s32 %s24, %s36
      %s38 = ssub.s32 %s25, %s32
      %s39 = sor.u32 %s37, %s38
      %p40 = scmp.eq.s32.totalorder %s39, 0
      %s42 = sadd.s32 %s41, 1
      %s43 = scalar_select %p40, %s41, %s42
      %p46 = pneg %p40
      %p47 = scmp.eq.s32.totalorder %s17, 1
      %p48 = por %p46, %p47
      %p49 = scmp.ne.s32.totalorder %s41, %s44
      %p50 = scmp.eq.s32.totalorder %s17, 0
      %p51 = por %p49, %p50
      %p52 = scmp.ne.s32.totalorder %s41, %s44
      %p53 = scmp.eq.s32.totalorder %s22, 1
      %p54 = por %p52, %p53
      %p55 = scmp.ne.s32.totalorder %s44, %s45
      %p56 = scmp.eq.s32.totalorder %s22, 0
      %p57 = por %p55, %p56
      %p58 = scmp.ne.s32.totalorder %s44, %s45
      %p59 = scmp.eq.s32.totalorder %s23, 1
      %p60 = por %p58, %p59
      %p62 = scmp.ne.s32.totalorder %s45, %s61
      %p63 = scmp.eq.s32.totalorder %s23, 0
      %p64 = por %p62, %p63
      %s65 = ssub.s32 %s24, %s36
      %s66 = ssub.s32 %s25, %s32
      %s67 = sor.u32 %s65, %s66
      %p68 = scmp.eq.s32.totalorder %s67, 0
      %s70 = sadd.s32 %s69, 1
      %s71 = scalar_select %p68, %s69, %s70
      %p74 = pneg %p68
      %p75 = scmp.eq.s32.totalorder %s17, 1
      %p76 = por %p74, %p75
      %p77 = scmp.ne.s32.totalorder %s69, %s72
      %p78 = scmp.eq.s32.totalorder %s17, 0
      %p79 = por %p77, %p78
      %p80 = scmp.ne.s32.totalorder %s69, %s72
      %p81 = scmp.eq.s32.totalorder %s22, 1
      %p82 = por %p80, %p81
      %p83 = scmp.ne.s32.totalorder %s72, %s73
      %p84 = scmp.eq.s32.totalorder %s22, 0
      %p85 = por %p83, %p84
      %p86 = scmp.ne.s32.totalorder %s72, %s73
      %p87 = scmp.eq.s32.totalorder %s23, 1
      %p88 = por %p86, %p87
      %p90 = scmp.ne.s32.totalorder %s73, %s89
      %p91 = scmp.eq.s32.totalorder %s23, 0
      %p92 = por %p90, %p91
      %s94 = sadd.s32 %s93, 1
      %p97 = scmp.eq.s32.totalorder %s17, 1
      %p98 = scmp.ne.s32.totalorder %s93, %s95
      %p99 = scmp.eq.s32.totalorder %s17, 0
      %p100 = por %p98, %p99
      %p101 = scmp.ne.s32.totalorder %s93, %s95
      %p102 = scmp.eq.s32.totalorder %s22, 1
      %p103 = por %p101, %p102
      %p104 = scmp.ne.s32.totalorder %s95, %s96
      %p105 = scmp.eq.s32.totalorder %s22, 0
      %p106 = por %p104, %p105
      %p107 = scmp.ne.s32.totalorder %s95, %s96
      %p108 = scmp.eq.s32.totalorder %s23, 1
      %p109 = por %p107, %p108
      %p111 = scmp.ne.s32.totalorder %s96, %s110
      %p112 = scmp.eq.s32.totalorder %s23, 0
      %p113 = por %p111, %p112
      %s114 = ssub.s32 %s24, %s36
      %p115 = scmp.eq.s32.totalorder %s114, 0
      %s117 = sadd.s32 %s116, 1
      %s118 = scalar_select %p115, %s116, %s117
      %p121 = pneg %p115
      %p122 = scmp.eq.s32.totalorder %s17, 1
      %p123 = por %p121, %p122
      %p124 = scmp.ne.s32.totalorder %s116, %s119
      %p125 = scmp.eq.s32.totalorder %s17, 0
      %p126 = por %p124, %p125
      %p127 = scmp.ne.s32.totalorder %s116, %s119
      %p128 = scmp.eq.s32.totalorder %s22, 1
      %p129 = por %p127, %p128
      %p130 = scmp.ne.s32.totalorder %s119, %s120
      %p131 = scmp.eq.s32.totalorder %s22, 0
      %p132 = por %p130, %p131
      %p133 = scmp.ne.s32.totalorder %s119, %s120
      %p134 = scmp.eq.s32.totalorder %s23, 1
      %p135 = por %p133, %p134
      %p137 = scmp.ne.s32.totalorder %s120, %s136
      %p138 = scmp.eq.s32.totalorder %s23, 0
      %p139 = por %p137, %p138
      %s141 = sadd.s32 %s140, 1
      %p144 = scmp.eq.s32.totalorder %s17, 1
      %p145 = scmp.ne.s32.totalorder %s140, %s142
      %p146 = scmp.eq.s32.totalorder %s17, 0
      %p147 = por %p145, %p146
      %p148 = scmp.ne.s32.totalorder %s140, %s142
      %p149 = scmp.eq.s32.totalorder %s22, 1
      %p150 = por %p148, %p149
      %p151 = scmp.ne.s32.totalorder %s142, %s143
      %p152 = scmp.eq.s32.totalorder %s22, 0
      %p153 = por %p151, %p152
      %p154 = scmp.ne.s32.totalorder %s142, %s143
      %p155 = scmp.eq.s32.totalorder %s23, 1
      %p156 = por %p154, %p155
      %p158 = scmp.ne.s32.totalorder %s143, %s157
      %p159 = scmp.eq.s32.totalorder %s23, 0
      %p160 = por %p158, %p159
      %s162 = sadd.s32 %s161, 1
      %p165 = scmp.eq.s32.totalorder %s17, 1
      %p166 = scmp.ne.s32.totalorder %s161, %s163
      %p167 = scmp.eq.s32.totalorder %s17, 0
      %p168 = por %p166, %p167
      %p169 = scmp.ne.s32.totalorder %s161, %s163
      %p170 = scmp.eq.s32.totalorder %s22, 1
      %p171 = por %p169, %p170
      %p172 = scmp.ne.s32.totalorder %s163, %s164
      %p173 = scmp.eq.s32.totalorder %s22, 0
      %p174 = por %p172, %p173
      %p175 = scmp.ne.s32.totalorder %s163, %s164
      %p176 = scmp.eq.s32.totalorder %s23, 1
      %p177 = por %p175, %p176
      %p179 = scmp.ne.s32.totalorder %s164, %s178
      %p180 = scmp.eq.s32.totalorder %s23, 0
      %p181 = por %p179, %p180
      %s183 = sadd.s32 %s182, 1
      %p186 = scmp.eq.s32.totalorder %s17, 1
      %p187 = scmp.ne.s32.totalorder %s182, %s184
      %p188 = scmp.eq.s32.totalorder %s17, 0
      %p189 = por %p187, %p188
      %p190 = scmp.ne.s32.totalorder %s182, %s184
      %p191 = scmp.eq.s32.totalorder %s22, 1
      %p192 = por %p190, %p191
      %p193 = scmp.ne.s32.totalorder %s184, %s185
      %p194 = scmp.eq.s32.totalorder %s22, 0
      %p195 = por %p193, %p194
      %p196 = scmp.ne.s32.totalorder %s184, %s185
      %p197 = scmp.eq.s32.totalorder %s23, 1
      %p198 = por %p196, %p197
      %p200 = scmp.ne.s32.totalorder %s185, %s199
      %p201 = scmp.eq.s32.totalorder %s23, 0
      %p202 = por %p200, %p201
      %s204 = sadd.s32 %s203, 1
      %p207 = scmp.eq.s32.totalorder %s17, 1
      %p208 = scmp.ne.s32.totalorder %s203, %s205
      %p209 = scmp.eq.s32.totalorder %s17, 0
      %p210 = por %p208, %p209
      %p211 = scmp.ne.s32.totalorder %s203, %s205
      %p212 = scmp.eq.s32.totalorder %s22, 1
      %p213 = por %p211, %p212
      %p214 = scmp.ne.s32.totalorder %s205, %s206
      %p215 = scmp.eq.s32.totalorder %s22, 0
      %p216 = por %p214, %p215
      %p217 = scmp.ne.s32.totalorder %s205, %s206
      %p218 = scmp.eq.s32.totalorder %s23, 1
      %p219 = por %p217, %p218
      %p221 = scmp.ne.s32.totalorder %s206, %s220
      %p222 = scmp.eq.s32.totalorder %s23, 0
      %p223 = por %p221, %p222
      %s224 = ssub.s32 %s24, %s36
      %s225 = ssub.s32 %s25, %s32
      %s226 = sor.u32 %s224, %s225
      %p227 = scmp.eq.s32.totalorder %s226, 0
      %s229 = sadd.s32 %s228, 1
      %s230 = scalar_select %p227, %s228, %s229
      %p233 = pneg %p227
      %p234 = scmp.eq.s32.totalorder %s17, 1
      %p235 = por %p233, %p234
      %p236 = scmp.ne.s32.totalorder %s228, %s231
      %p237 = scmp.eq.s32.totalorder %s17, 0
      %p238 = por %p236, %p237
      %p239 = scmp.ne.s32.totalorder %s228, %s231
      %p240 = scmp.eq.s32.totalorder %s22, 1
      %p241 = por %p239, %p240
      %p242 = scmp.ne.s32.totalorder %s231, %s232
      %p243 = scmp.eq.s32.totalorder %s22, 0
      %p244 = por %p242, %p243
      %p245 = scmp.ne.s32.totalorder %s231, %s232
      %p246 = scmp.eq.s32.totalorder %s23, 1
      %p247 = por %p245, %p246
      %p249 = scmp.ne.s32.totalorder %s232, %s248
      %p250 = scmp.eq.s32.totalorder %s23, 0
      %p251 = por %p249, %p250
      %p252 = scmp.le.s32.totalorder 1, %s17
      %p253 = scmp.lt.s32.totalorder %s17, 3
      %p254 = pnand %p252, %p253
      %p255 = pneg %p254
      // Predicated region
      $region9: #{tpu_custom_call.1} parent=5 // pred_check
        _
      $region10: #{tpu_custom_call.1} parent=5 // pred_check_branch
        %257 = sbr.rel (%p254) target = $region12
      $region11: #{tpu_custom_call.1} parent=5 // pred_region
        %s258 = ssub.s32 %s17, 1
        // Predicated region
        $region13: #{tpu_custom_call.1} parent=11 // pred_check
          %p259 = pneg %p106
        $region14: #{tpu_custom_call.1} parent=11 // pred_check_branch
          %261 = sbr.rel (%p259) target = $region16
        $region15: #{tpu_custom_call.1} parent=11 // pred_region
          _
        $region16: #{tpu_custom_call.1} parent=11 // pred_fallthru
          _
        // Predicated region
        $region17: #{tpu_custom_call.1} parent=11 // pred_check
          %p262 = pneg %p153
        $region18: #{tpu_custom_call.1} parent=11 // pred_check_branch
          %264 = sbr.rel (%p262) target = $region20
        $region19: #{tpu_custom_call.1} parent=11 // pred_region
          _
        $region20: #{tpu_custom_call.1} parent=11 // pred_fallthru
          _
        // Predicated region
        $region21: #{tpu_custom_call.1} parent=11 // pred_check
          %p265 = pneg %p174
        $region22: #{tpu_custom_call.1} parent=11 // pred_check_branch
          %267 = sbr.rel (%p265) target = $region24
        $region23: #{tpu_custom_call.1} parent=11 // pred_region
          _
        $region24: #{tpu_custom_call.1} parent=11 // pred_fallthru
          _
        // Predicated region
        $region25: #{tpu_custom_call.1} parent=11 // pred_check
          %p268 = pneg %p195
        $region26: #{tpu_custom_call.1} parent=11 // pred_check_branch
          %270 = sbr.rel (%p268) target = $region28
        $region27: #{tpu_custom_call.1} parent=11 // pred_region
          _
        $region28: #{tpu_custom_call.1} parent=11 // pred_fallthru
          _
        // Predicated region
        $region29: #{tpu_custom_call.1} parent=11 // pred_check
          %p271 = pneg %p216
        $region30: #{tpu_custom_call.1} parent=11 // pred_check_branch
          %273 = sbr.rel (%p271) target = $region32
        $region31: #{tpu_custom_call.1} parent=11 // pred_region
          _
        $region32: #{tpu_custom_call.1} parent=11 // pred_fallthru
          _
      $region12: #{tpu_custom_call.1} parent=5 // pred_fallthru
        _
      %p274 = scmp.lt.s32.totalorder %s17, 2
      // Predicated region
      $region33: #{tpu_custom_call.1} parent=5 // pred_check
        %p275 = pneg %p274
      $region34: #{tpu_custom_call.1} parent=5 // pred_check_branch
        %277 = sbr.rel (%p275) target = $region36
      $region35: #{tpu_custom_call.1} parent=5 // pred_region
        // Predicated region
        $region37: #{tpu_custom_call.1} parent=35 // pred_check
          %p278 = pneg %p51
        $region38: #{tpu_custom_call.1} parent=35 // pred_check_branch
          %280 = sbr.rel (%p278) target = $region40
        $region39: #{tpu_custom_call.1} parent=35 // pred_region
          %s281 = smul.u32 8, %s25
          %p282 = scmp.lt.s32.totalorder %s24, 1
          %s283 = scalar_select %p282, %s24, 1
          %p284 = scmp.lt.s32.totalorder %s281, 7
          %s285 = scalar_select %p284, %s281, 7
          %s286 = smul.addr %s285, 4
          %s287 = smul.addr %s283, 32
          %s288 = sadd.s32 %s286, %s287
          %s289 = smul.addr %s288, 4
          %s290 = scalar_lea.vmem %s0, %s289
          %s291 = smul.u32 8, %s25
        $region40: #{tpu_custom_call.1} parent=35 // pred_fallthru
          _
        // Predicated region
        $region41: #{tpu_custom_call.1} parent=35 // pred_check
          %p292 = pneg %p79
        $region42: #{tpu_custom_call.1} parent=35 // pred_check_branch
          %294 = sbr.rel (%p292) target = $region44
        $region43: #{tpu_custom_call.1} parent=35 // pred_region
          %s295 = smul.u32 32, %s25
          %p296 = scmp.lt.s32.totalorder %s24, 1
          %s297 = scalar_select %p296, %s24, 1
          %p298 = scmp.lt.s32.totalorder %s295, 31
          %s299 = scalar_select %p298, %s295, 31
          %s300 = smul.addr %s297, 32
          %s301 = sadd.s32 %s299, %s300
          %s302 = smul.addr %s301, 8
          %s303 = scalar_lea.vmem %s1, %s302
          %s304 = smul.u32 32, %s25
        $region44: #{tpu_custom_call.1} parent=35 // pred_fallthru
          _
        // Predicated region
        $region45: #{tpu_custom_call.1} parent=35 // pred_check
          %p305 = pneg %p126
        $region46: #{tpu_custom_call.1} parent=35 // pred_check_branch
          %307 = sbr.rel (%p305) target = $region48
        $region47: #{tpu_custom_call.1} parent=35 // pred_region
          %p308 = scmp.lt.s32.totalorder %s24, 1
          %s309 = scalar_select %p308, %s24, 1
          %s310 = scalar_lea.vmem %s3, %s309
        $region48: #{tpu_custom_call.1} parent=35 // pred_fallthru
          _
      $region36: #{tpu_custom_call.1} parent=5 // pred_fallthru
        _
      %p311 = scmp.le.s32.totalorder 1, %s17
      %p312 = scmp.lt.s32.totalorder %s17, 3
      %p313 = pnand %p311, %p312
      %p314 = pneg %p313
      // Predicated region
      $region49: #{tpu_custom_call.1} parent=5 // pred_check
        _
      $region50: #{tpu_custom_call.1} parent=5 // pred_check_branch
        %316 = sbr.rel (%p313) target = $region52
      $region51: #{tpu_custom_call.1} parent=5 // pred_region
        %s317 = ssub.s32 %s17, 1
        %s318 = smul.u32 8, %s27
        %p319 = scmp.lt.s32.totalorder %s26, 1
        %s320 = scalar_select %p319, %s26, 1
        %p321 = scmp.lt.s32.totalorder %s318, 7
        %s322 = scalar_select %p321, %s318, 7
        %s323 = smul.addr %s322, 4
        %s324 = smul.addr %s320, 32
        %s325 = sadd.s32 %s323, %s324
        %s326 = smul.addr %s325, 4
        %s327 = scalar_lea.vmem %s0, %s326
        %p328 = pneg %p57
        %p329 = pneg %p54
        %s330 = smul.u32 32, %s27
        %p331 = scmp.lt.s32.totalorder %s26, 1
        %s332 = scalar_select %p331, %s26, 1
        %p333 = scmp.lt.s32.totalorder %s330, 31
        %s334 = scalar_select %p333, %s330, 31
        %s335 = smul.addr %s332, 32
        %s336 = sadd.s32 %s334, %s335
        %s337 = smul.addr %s336, 8
        %s338 = scalar_lea.vmem %s1, %s337
        %p339 = pneg %p85
        %p340 = pneg %p82
        %p341 = pneg %p106
        %p342 = pneg %p103
        %p343 = scmp.lt.s32.totalorder %s26, 1
        %s344 = scalar_select %p343, %s26, 1
        %s345 = scalar_lea.vmem %s3, %s344
        %p346 = pneg %p132
        %p347 = pneg %p129
        %p348 = pneg %p153
        %p349 = pneg %p150
        %p350 = pneg %p174
        %p351 = pneg %p171
        %p352 = pneg %p195
        %p353 = pneg %p192
        %p354 = pneg %p216
        %p355 = pneg %p213
        %p356 = pneg %p244
        %p357 = pneg %p241
        %s358 = sand.u32 %s231, 1
        %s359 = scalar_lea.sflag [#allocation3], %s358
        %s360 = sand.u32 %s231, 1
        %s361 = smul.addr %s360, 64
        %s362 = scalar_lea.vmem [#allocation2], %s361
        %s363 = smul.u32 8, %s27
        %p364 = scmp.lt.s32.totalorder %s26, 1
        %s365 = scalar_select %p364, %s26, 1
        %p366 = scmp.lt.s32.totalorder %s363, 7
        %s367 = scalar_select %p366, %s363, 7
        %s368 = smul.addr %s367, 4
        %s369 = smul.addr %s365, 32
        %s370 = sadd.s32 %s368, %s369
        %s371 = smul.addr %s370, 4
        %s372 = scalar_lea.vmem %s0, %s371
        %s373 = smul.u32 8, %s27
        %s374 = smul.u32 32, %s27
        %p375 = scmp.lt.s32.totalorder %s26, 1
        %s376 = scalar_select %p375, %s26, 1
        %p377 = scmp.lt.s32.totalorder %s374, 31
        %s378 = scalar_select %p377, %s374, 31
        %s379 = smul.addr %s376, 32
        %s380 = sadd.s32 %s378, %s379
        %s381 = smul.addr %s380, 8
        %s382 = scalar_lea.vmem %s1, %s381
        %s383 = smul.u32 32, %s27
        %p384 = scmp.lt.s32.totalorder %s26, 1
        %s385 = scalar_select %p384, %s26, 1
        %s386 = scalar_lea.vmem %s3, %s385
        %s387 = smul.u32 8, %s27
        %v389 = vld [vmem:[%s372] sm:$0xf]
        %v390 = vld [vmem:[%s372 + $0x4] sm:$0xf]
        %v391 = vld [vmem:[%s372 + $0x8] sm:$0xf]
        %v392 = vld [vmem:[%s372 + $0xc] sm:$0xf]
        %v393 = vld [vmem:[%s372 + $0x10] sm:$0xf]
        %v394 = vld [vmem:[%s372 + $0x14] sm:$0xf]
        %v395 = vld [vmem:[%s372 + $0x18] sm:$0xf]
        %v396 = vld [vmem:[%s372 + $0x1c] sm:$0xf]
        %v397 = vld [vmem:[%s372 + $0x20] sm:$0xf]
        %v398 = vld [vmem:[%s372 + $0x24] sm:$0xf]
        %v399 = vld [vmem:[%s372 + $0x28] sm:$0xf]
        %v400 = vld [vmem:[%s372 + $0x2c] sm:$0xf]
        %v401 = vld [vmem:[%s372 + $0x30] sm:$0xf]
        %v402 = vld [vmem:[%s372 + $0x34] sm:$0xf]
        %v403 = vld [vmem:[%s372 + $0x38] sm:$0xf]
        %v404 = vld [vmem:[%s372 + $0x3c] sm:$0xf]
        %v405 = vld [vmem:[%s372 + $0x40] sm:$0xf]
        %v406 = vld [vmem:[%s372 + $0x44] sm:$0xf]
        %v407 = vld [vmem:[%s372 + $0x48] sm:$0xf]
        %v408 = vld [vmem:[%s372 + $0x4c] sm:$0xf]
        %v409 = vld [vmem:[%s372 + $0x50] sm:$0xf]
        %v410 = vld [vmem:[%s372 + $0x54] sm:$0xf]
        %v411 = vld [vmem:[%s372 + $0x58] sm:$0xf]
        %v412 = vld [vmem:[%s372 + $0x5c] sm:$0xf]
        %v413 = vld [vmem:[%s372 + $0x60] sm:$0xf]
        %v414 = vld [vmem:[%s372 + $0x64] sm:$0xf]
        %v415 = vld [vmem:[%s372 + $0x68] sm:$0xf]
        %v416 = vld [vmem:[%s372 + $0x6c] sm:$0xf]
        %v417 = vld [vmem:[%s372 + $0x70] sm:$0xf]
        %v418 = vld [vmem:[%s372 + $0x74] sm:$0xf]
        %v419 = vld [vmem:[%s372 + $0x78] sm:$0xf]
        %v420 = vld [vmem:[%s372 + $0x7c] sm:$0xf]
        %v421 = vld [vmem:[%s4] sm:$0xf]
        %v422 = vld [vmem:[%s4 + $0x4] sm:$0xf]
        %v423 = vld [vmem:[%s4 + $0x8] sm:$0xf]
        %v424 = vld [vmem:[%s4 + $0xc] sm:$0xf]
        %v425 = vld [vmem:[%s4 + $0x10] sm:$0xf]
        %v426 = vld [vmem:[%s4 + $0x14] sm:$0xf]
        %v427 = vld [vmem:[%s4 + $0x18] sm:$0xf]
        %v428 = vld [vmem:[%s4 + $0x1c] sm:$0xf]
        %v429 = vld [vmem:[%s4 + $0x20] sm:$0xf]
        %v430 = vld [vmem:[%s4 + $0x24] sm:$0xf]
        %v431 = vld [vmem:[%s4 + $0x28] sm:$0xf]
        %v432 = vld [vmem:[%s4 + $0x2c] sm:$0xf]
        %v433 = vld [vmem:[%s4 + $0x30] sm:$0xf]
        %v434 = vld [vmem:[%s4 + $0x34] sm:$0xf]
        %v435 = vld [vmem:[%s4 + $0x38] sm:$0xf]
        %v436 = vld [vmem:[%s4 + $0x3c] sm:$0xf]
        %v469 = vunpack.c.l.b16 %v389
        %v470 = vunpack.c.l.b16 %v390
        %v471 = vunpack.c.l.b16 %v391
        %v472 = vunpack.c.l.b16 %v392
        %v473 = vunpack.c.l.b16 %v393
        %v474 = vunpack.c.l.b16 %v394
        %v475 = vunpack.c.l.b16 %v395
        %v476 = vunpack.c.l.b16 %v396
        %v477 = vunpack.c.l.b16 %v397
        %v478 = vunpack.c.l.b16 %v398
        %v479 = vunpack.c.l.b16 %v399
        %v480 = vunpack.c.l.b16 %v400
        %v481 = vunpack.c.l.b16 %v401
        %v482 = vunpack.c.l.b16 %v402
        %v483 = vunpack.c.l.b16 %v403
        %v484 = vunpack.c.l.b16 %v404
        %v485 = vunpack.c.l.b16 %v405
        %v486 = vunpack.c.l.b16 %v406
        %v487 = vunpack.c.l.b16 %v407
        %v488 = vunpack.c.l.b16 %v408
        %v489 = vunpack.c.l.b16 %v409
        %v490 = vunpack.c.l.b16 %v410
        %v491 = vunpack.c.l.b16 %v411
        %v492 = vunpack.c.l.b16 %v412
        %v493 = vunpack.c.l.b16 %v413
        %v494 = vunpack.c.l.b16 %v414
        %v495 = vunpack.c.l.b16 %v415
        %v496 = vunpack.c.l.b16 %v416
        %v497 = vunpack.c.l.b16 %v417
        %v498 = vunpack.c.l.b16 %v418
        %v499 = vunpack.c.l.b16 %v419
        %v500 = vunpack.c.l.b16 %v420
        %v501 = vpack.c.b16 %v470, %v469
        %v502 = vpack.c.b16 %v472, %v471
        %v503 = vpack.c.b16 %v474, %v473
        %v504 = vpack.c.b16 %v476, %v475
        %v505 = vpack.c.b16 %v478, %v477
        %v506 = vpack.c.b16 %v480, %v479
        %v507 = vpack.c.b16 %v482, %v481
        %v508 = vpack.c.b16 %v484, %v483
        %v509 = vpack.c.b16 %v486, %v485
        %v510 = vpack.c.b16 %v488, %v487
        %v511 = vpack.c.b16 %v490, %v489
        %v512 = vpack.c.b16 %v492, %v491
        %v513 = vpack.c.b16 %v494, %v493
        %v514 = vpack.c.b16 %v496, %v495
        %v515 = vpack.c.b16 %v498, %v497
        %v516 = vpack.c.b16 %v500, %v499
        %v549 = vunpack.c.l.b16 %v421
        %v550 = vunpack.c.l.b16 %v422
        %v551 = vunpack.c.l.b16 %v423
        %v552 = vunpack.c.l.b16 %v424
        %v553 = vunpack.c.l.b16 %v425
        %v554 = vunpack.c.l.b16 %v426
        %v555 = vunpack.c.l.b16 %v427
        %v556 = vunpack.c.l.b16 %v428
        %v557 = vunpack.c.l.b16 %v429
        %v558 = vunpack.c.l.b16 %v430
        %v559 = vunpack.c.l.b16 %v431
        %v560 = vunpack.c.l.b16 %v432
        %v561 = vunpack.c.l.b16 %v433
        %v562 = vunpack.c.l.b16 %v434
        %v563 = vunpack.c.l.b16 %v435
        %v564 = vunpack.c.l.b16 %v436
        %v565 = vpack.c.b16 %v550, %v549
        %v566 = vpack.c.b16 %v552, %v551
        %v567 = vpack.c.b16 %v554, %v553
        %v568 = vpack.c.b16 %v556, %v555
        %v569 = vpack.c.b16 %v558, %v557
        %v570 = vpack.c.b16 %v560, %v559
        %v571 = vpack.c.b16 %v562, %v561
        %v572 = vpack.c.b16 %v564, %v563
        %581 = vmatprep.subr.bf16.mxu0 0
        %582 = vmatpush1.bf16.msra.mxu0 %v565
        %583 = vmatprep.subr.bf16.mxu0 0
        %584 = vmatpush1.bf16.msra.mxu0 %v566
        %585 = vmatprep.subr.bf16.mxu0 0
        %586 = vmatpush1.bf16.msra.mxu0 %v567
        %587 = vmatprep.subr.bf16.mxu0 0
        %588 = vmatpush1.bf16.msra.mxu0 %v568
        %589 = vmatprep.subr.bf16.mxu0 0
        %590 = vmatpush1.bf16.msra.mxu0 %v569
        %591 = vmatprep.subr.bf16.mxu0 0
        %592 = vmatpush1.bf16.msra.mxu0 %v570
        %593 = vmatprep.subr.bf16.mxu0 0
        %594 = vmatpush1.bf16.msra.mxu0 %v571
        %595 = vmatprep.subr.bf16.mxu0 0
        %596 = vmatpush1.bf16.msra.mxu0 %v572
        %597 = vmatprep.subr.bf16.mxu0 0
        %598 = vmatpush1.bf16.msra.mxu0 0
        %599 = vmatprep.subr.bf16.mxu0 0
        %600 = vmatpush1.bf16.msra.mxu0 0
        %601 = vmatprep.subr.bf16.mxu0 0
        %602 = vmatpush1.bf16.msra.mxu0 0
        %603 = vmatprep.subr.bf16.mxu0 0
        %604 = vmatpush1.bf16.msra.mxu0 0
        %605 = vmatprep.subr.bf16.mxu0 0
        %606 = vmatpush1.bf16.msra.mxu0 0
        %607 = vmatprep.subr.bf16.mxu0 0
        %608 = vmatpush1.bf16.msra.mxu0 0
        %609 = vmatprep.subr.bf16.mxu0 0
        %610 = vmatpush1.bf16.msra.mxu0 0
        %611 = vmatprep.subr.bf16.mxu0 0
        %612 = vmatpush1.bf16.msra.mxu0 0
        %613 = vmatprep.mubr.bf16.mxu0 0
        %614 = vmatmul.mubr.bf16.gmra.mrb[0].mxu0 %v501
        %v615 = vpop.f32.mrb[0].mxu0
        %v616 = vadd.f32 0.0, %v615
        %v617 = vpop.f32.mrb[0].mxu0
        %v618 = vpop.f32.mrb[0].mxu0
        %v619 = vadd.f32 0.0, %v618
        %v620 = vpop.f32.mrb[0].mxu0
        %621 = vmatprep.mubr.bf16.mxu0 0
        %622 = vmatmul.mubr.bf16.gmra.mrb[0].mxu0 %v502
        %v623 = vpop.f32.mrb[0].mxu0
        %v624 = vadd.f32 0.0, %v623
        %v625 = vpop.f32.mrb[0].mxu0
        %v626 = vpop.f32.mrb[0].mxu0
        %v627 = vadd.f32 0.0, %v626
        %v628 = vpop.f32.mrb[0].mxu0
        %629 = vmatprep.mubr.bf16.mxu0 0
        %630 = vmatmul.mubr.bf16.gmra.mrb[0].mxu0 %v503
        %v631 = vpop.f32.mrb[0].mxu0
        %v632 = vadd.f32 0.0, %v631
        %v633 = vpop.f32.mrb[0].mxu0
        %v634 = vpop.f32.mrb[0].mxu0
        %v635 = vadd.f32 0.0, %v634
        %v636 = vpop.f32.mrb[0].mxu0
        %637 = vmatprep.mubr.bf16.mxu0 0
        %638 = vmatmul.mubr.bf16.gmra.mrb[0].mxu0 %v504
        %v639 = vpop.f32.mrb[0].mxu0
        %v640 = vadd.f32 0.0, %v639
        %v641 = vpop.f32.mrb[0].mxu0
        %v642 = vpop.f32.mrb[0].mxu0
        %v643 = vadd.f32 0.0, %v642
        %v644 = vpop.f32.mrb[0].mxu0
        %645 = vmatprep.mubr.bf16.mxu0 0
        %646 = vmatmul.mubr.bf16.gmra.mrb[0].mxu0 %v505
        %v647 = vpop.f32.mrb[0].mxu0
        %v648 = vadd.f32 0.0, %v647
        %v649 = vpop.f32.mrb[0].mxu0
        %v650 = vpop.f32.mrb[0].mxu0
        %v651 = vadd.f32 0.0, %v650
        %v652 = vpop.f32.mrb[0].mxu0
        %653 = vmatprep.mubr.bf16.mxu0 0
        %654 = vmatmul.mubr.bf16.gmra.mrb[0].mxu0 %v506
        %v655 = vpop.f32.mrb[0].mxu0
        %v656 = vadd.f32 0.0, %v655
        %v657 = vpop.f32.mrb[0].mxu0
        %v658 = vpop.f32.mrb[0].mxu0
        %v659 = vadd.f32 0.0, %v658
        %v660 = vpop.f32.mrb[0].mxu0
        %661 = vmatprep.mubr.bf16.mxu0 0
        %662 = vmatmul.mubr.bf16.gmra.mrb[0].mxu0 %v507
        %v663 = vpop.f32.mrb[0].mxu0
        %v664 = vadd.f32 0.0, %v663
        %v665 = vpop.f32.mrb[0].mxu0
        %v666 = vpop.f32.mrb[0].mxu0
        %v667 = vadd.f32 0.0, %v666
        %v668 = vpop.f32.mrb[0].mxu0
        %669 = vmatprep.mubr.bf16.mxu0 0
        %670 = vmatmul.mubr.bf16.gmra.mrb[0].mxu0 %v508
        %v671 = vpop.f32.mrb[0].mxu0
        %v672 = vadd.f32 0.0, %v671
        %v673 = vpop.f32.mrb[0].mxu0
        %v674 = vpop.f32.mrb[0].mxu0
        %v675 = vadd.f32 0.0, %v674
        %v676 = vpop.f32.mrb[0].mxu0
        %677 = vmatprep.mubr.bf16.mxu0 0
        %678 = vmatmul.mubr.bf16.gmra.mrb[0].mxu0 %v509
        %v679 = vpop.f32.mrb[0].mxu0
        %v680 = vadd.f32 0.0, %v679
        %v681 = vpop.f32.mrb[0].mxu0
        %v682 = vpop.f32.mrb[0].mxu0
        %v683 = vadd.f32 0.0, %v682
        %v684 = vpop.f32.mrb[0].mxu0
        %685 = vmatprep.mubr.bf16.mxu0 0
        %686 = vmatmul.mubr.bf16.gmra.mrb[0].mxu0 %v510
        %v687 = vpop.f32.mrb[0].mxu0
        %v688 = vadd.f32 0.0, %v687
        %v689 = vpop.f32.mrb[0].mxu0
        %v690 = vpop.f32.mrb[0].mxu0
        %v691 = vadd.f32 0.0, %v690
        %v692 = vpop.f32.mrb[0].mxu0
        %693 = vmatprep.mubr.bf16.mxu0 0
        %694 = vmatmul.mubr.bf16.gmra.mrb[0].mxu0 %v511
        %v695 = vpop.f32.mrb[0].mxu0
        %v696 = vadd.f32 0.0, %v695
        %v697 = vpop.f32.mrb[0].mxu0
        %v698 = vpop.f32.mrb[0].mxu0
        %v699 = vadd.f32 0.0, %v698
        %v700 = vpop.f32.mrb[0].mxu0
        %701 = vmatprep.mubr.bf16.mxu0 0
        %702 = vmatmul.mubr.bf16.gmra.mrb[0].mxu0 %v512
        %v703 = vpop.f32.mrb[0].mxu0
        %v704 = vadd.f32 0.0, %v703
        %v705 = vpop.f32.mrb[0].mxu0
        %v706 = vpop.f32.mrb[0].mxu0
        %v707 = vadd.f32 0.0, %v706
        %v708 = vpop.f32.mrb[0].mxu0
        %709 = vmatprep.mubr.bf16.mxu0 0
        %710 = vmatmul.mubr.bf16.gmra.mrb[0].mxu0 %v513
        %v711 = vpop.f32.mrb[0].mxu0
        %v712 = vadd.f32 0.0, %v711
        %v713 = vpop.f32.mrb[0].mxu0
        %v714 = vpop.f32.mrb[0].mxu0
        %v715 = vadd.f32 0.0, %v714
        %v716 = vpop.f32.mrb[0].mxu0
        %717 = vmatprep.mubr.bf16.mxu0 0
        %718 = vmatmul.mubr.bf16.gmra.mrb[0].mxu0 %v514
        %v719 = vpop.f32.mrb[0].mxu0
        %v720 = vadd.f32 0.0, %v719
        %v721 = vpop.f32.mrb[0].mxu0
        %v722 = vpop.f32.mrb[0].mxu0
        %v723 = vadd.f32 0.0, %v722
        %v724 = vpop.f32.mrb[0].mxu0
        %725 = vmatprep.mubr.bf16.mxu0 0
        %726 = vmatmul.mubr.bf16.gmra.mrb[0].mxu0 %v515
        %v727 = vpop.f32.mrb[0].mxu0
        %v728 = vadd.f32 0.0, %v727
        %v729 = vpop.f32.mrb[0].mxu0
        %v730 = vpop.f32.mrb[0].mxu0
        %v731 = vadd.f32 0.0, %v730
        %v732 = vpop.f32.mrb[0].mxu0
        %733 = vmatprep.mubr.bf16.mxu0 0
        %734 = vmatmul.mubr.bf16.gmra.mrb[0].mxu0 %v516
        %v735 = vpop.f32.mrb[0].mxu0
        %v736 = vadd.f32 0.0, %v735
        %v737 = vpop.f32.mrb[0].mxu0
        %v738 = vpop.f32.mrb[0].mxu0
        %v739 = vadd.f32 0.0, %v738
        %v740 = vpop.f32.mrb[0].mxu0
        %741 = vdwg.mxu0
        %v742 = vld [vmem:[%s382] sm:$0xff]
        %v743 = vld [vmem:[%s382 + $0x8] sm:$0xff]
        %v744 = vld [vmem:[%s382 + $0x10] sm:$0xff]
        %v745 = vld [vmem:[%s382 + $0x18] sm:$0xff]
        %v746 = vld [vmem:[%s382 + $0x20] sm:$0xff]
        %v747 = vld [vmem:[%s382 + $0x28] sm:$0xff]
        %v748 = vld [vmem:[%s382 + $0x30] sm:$0xff]
        %v749 = vld [vmem:[%s382 + $0x38] sm:$0xff]
        %v750 = vld [vmem:[%s382 + $0x40] sm:$0xff]
        %v751 = vld [vmem:[%s382 + $0x48] sm:$0xff]
        %v752 = vld [vmem:[%s382 + $0x50] sm:$0xff]
        %v753 = vld [vmem:[%s382 + $0x58] sm:$0xff]
        %v754 = vld [vmem:[%s382 + $0x60] sm:$0xff]
        %v755 = vld [vmem:[%s382 + $0x68] sm:$0xff]
        %v756 = vld [vmem:[%s382 + $0x70] sm:$0xff]
        %v757 = vld [vmem:[%s382 + $0x78] sm:$0xff]
        %v758 = vld [vmem:[%s382 + $0x80] sm:$0xff]
        %v759 = vld [vmem:[%s382 + $0x88] sm:$0xff]
        %v760 = vld [vmem:[%s382 + $0x90] sm:$0xff]
        %v761 = vld [vmem:[%s382 + $0x98] sm:$0xff]
        %v762 = vld [vmem:[%s382 + $0xa0] sm:$0xff]
        %v763 = vld [vmem:[%s382 + $0xa8] sm:$0xff]
        %v764 = vld [vmem:[%s382 + $0xb0] sm:$0xff]
        %v765 = vld [vmem:[%s382 + $0xb8] sm:$0xff]
        %v766 = vld [vmem:[%s382 + $0xc0] sm:$0xff]
        %v767 = vld [vmem:[%s382 + $0xc8] sm:$0xff]
        %v768 = vld [vmem:[%s382 + $0xd0] sm:$0xff]
        %v769 = vld [vmem:[%s382 + $0xd8] sm:$0xff]
        %v770 = vld [vmem:[%s382 + $0xe0] sm:$0xff]
        %v771 = vld [vmem:[%s382 + $0xe8] sm:$0xff]
        %v772 = vld [vmem:[%s382 + $0xf0] sm:$0xff]
        %v773 = vld [vmem:[%s382 + $0xf8] sm:$0xff]
        %v774 = vlaneseq
        %v775 = vand.u32 %v774, 127
        %776 = vset.pattern.permute.xlu0 0
        %777 = vperm.xlu0 %776, %v742
        %v778 = vpop.permute.xlu0 %777
        %779 = vset.pattern.permute.xlu0 0
        %780 = vperm.xlu0 %779, %v743
        %v781 = vpop.permute.xlu0 %780
        %782 = vset.pattern.permute.xlu0 0
        %783 = vperm.xlu0 %782, %v744
        %v784 = vpop.permute.xlu0 %783
        %785 = vset.pattern.permute.xlu0 0
        %786 = vperm.xlu0 %785, %v745
        %v787 = vpop.permute.xlu0 %786
        %788 = vset.pattern.permute.xlu0 0
        %789 = vperm.xlu0 %788, %v746
        %v790 = vpop.permute.xlu0 %789
        %791 = vset.pattern.permute.xlu0 0
        %792 = vperm.xlu0 %791, %v747
        %v793 = vpop.permute.xlu0 %792
        %794 = vset.pattern.permute.xlu0 0
        %795 = vperm.xlu0 %794, %v748
        %v796 = vpop.permute.xlu0 %795
        %797 = vset.pattern.permute.xlu0 0
        %798 = vperm.xlu0 %797, %v749
        %v799 = vpop.permute.xlu0 %798
        %800 = vset.pattern.permute.xlu0 0
        %801 = vperm.xlu0 %800, %v750
        %v802 = vpop.permute.xlu0 %801
        %803 = vset.pattern.permute.xlu0 0
        %804 = vperm.xlu0 %803, %v751
        %v805 = vpop.permute.xlu0 %804
        %806 = vset.pattern.permute.xlu0 0
        %807 = vperm.xlu0 %806, %v752
        %v808 = vpop.permute.xlu0 %807
        %809 = vset.pattern.permute.xlu0 0
        %810 = vperm.xlu0 %809, %v753
        %v811 = vpop.permute.xlu0 %810
        %812 = vset.pattern.permute.xlu0 0
        %813 = vperm.xlu0 %812, %v754
        %v814 = vpop.permute.xlu0 %813
        %815 = vset.pattern.permute.xlu0 0
        %816 = vperm.xlu0 %815, %v755
        %v817 = vpop.permute.xlu0 %816
        %818 = vset.pattern.permute.xlu0 0
        %819 = vperm.xlu0 %818, %v756
        %v820 = vpop.permute.xlu0 %819
        %821 = vset.pattern.permute.xlu0 0
        %822 = vperm.xlu0 %821, %v757
        %v823 = vpop.permute.xlu0 %822
        %824 = vset.pattern.permute.xlu0 0
        %825 = vperm.xlu0 %824, %v758
        %v826 = vpop.permute.xlu0 %825
        %827 = vset.pattern.permute.xlu0 0
        %828 = vperm.xlu0 %827, %v759
        %v829 = vpop.permute.xlu0 %828
        %830 = vset.pattern.permute.xlu0 0
        %831 = vperm.xlu0 %830, %v760
        %v832 = vpop.permute.xlu0 %831
        %833 = vset.pattern.permute.xlu0 0
        %834 = vperm.xlu0 %833, %v761
        %v835 = vpop.permute.xlu0 %834
        %836 = vset.pattern.permute.xlu0 0
        %837 = vperm.xlu0 %836, %v762
        %v838 = vpop.permute.xlu0 %837
        %839 = vset.pattern.permute.xlu0 0
        %840 = vperm.xlu0 %839, %v763
        %v841 = vpop.permute.xlu0 %840
        %842 = vset.pattern.permute.xlu0 0
        %843 = vperm.xlu0 %842, %v764
        %v844 = vpop.permute.xlu0 %843
        %845 = vset.pattern.permute.xlu0 0
        %846 = vperm.xlu0 %845, %v765
        %v847 = vpop.permute.xlu0 %846
        %848 = vset.pattern.permute.xlu0 0
        %849 = vperm.xlu0 %848, %v766
        %v850 = vpop.permute.xlu0 %849
        %851 = vset.pattern.permute.xlu0 0
        %852 = vperm.xlu0 %851, %v767
        %v853 = vpop.permute.xlu0 %852
        %854 = vset.pattern.permute.xlu0 0
        %855 = vperm.xlu0 %854, %v768
        %v856 = vpop.permute.xlu0 %855
        %857 = vset.pattern.permute.xlu0 0
        %858 = vperm.xlu0 %857, %v769
        %v859 = vpop.permute.xlu0 %858
        %860 = vset.pattern.permute.xlu0 0
        %861 = vperm.xlu0 %860, %v770
        %v862 = vpop.permute.xlu0 %861
        %863 = vset.pattern.permute.xlu0 0
        %864 = vperm.xlu0 %863, %v771
        %v865 = vpop.permute.xlu0 %864
        %866 = vset.pattern.permute.xlu0 0
        %867 = vperm.xlu0 %866, %v772
        %v868 = vpop.permute.xlu0 %867
        %869 = vset.pattern.permute.xlu0 0
        %870 = vperm.xlu0 %869, %v773
        %v871 = vpop.permute.xlu0 %870
        %vm872 = vcmp.eq.s32.totalorder %v778, %v775
        %vm873 = vcmp.eq.s32.totalorder %v781, %v775
        %vm874 = vcmp.eq.s32.totalorder %v784, %v775
        %vm875 = vcmp.eq.s32.totalorder %v787, %v775
        %vm876 = vcmp.eq.s32.totalorder %v790, %v775
        %vm877 = vcmp.eq.s32.totalorder %v793, %v775
        %vm878 = vcmp.eq.s32.totalorder %v796, %v775
        %vm879 = vcmp.eq.s32.totalorder %v799, %v775
        %vm880 = vcmp.eq.s32.totalorder %v802, %v775
        %vm881 = vcmp.eq.s32.totalorder %v805, %v775
        %vm882 = vcmp.eq.s32.totalorder %v808, %v775
        %vm883 = vcmp.eq.s32.totalorder %v811, %v775
        %vm884 = vcmp.eq.s32.totalorder %v814, %v775
        %vm885 = vcmp.eq.s32.totalorder %v817, %v775
        %vm886 = vcmp.eq.s32.totalorder %v820, %v775
        %vm887 = vcmp.eq.s32.totalorder %v823, %v775
        %vm888 = vcmp.eq.s32.totalorder %v826, %v775
        %vm889 = vcmp.eq.s32.totalorder %v829, %v775
        %vm890 = vcmp.eq.s32.totalorder %v832, %v775
        %vm891 = vcmp.eq.s32.totalorder %v835, %v775
        %vm892 = vcmp.eq.s32.totalorder %v838, %v775
        %vm893 = vcmp.eq.s32.totalorder %v841, %v775
        %vm894 = vcmp.eq.s32.totalorder %v844, %v775
        %vm895 = vcmp.eq.s32.totalorder %v847, %v775
        %vm896 = vcmp.eq.s32.totalorder %v850, %v775
        %vm897 = vcmp.eq.s32.totalorder %v853, %v775
        %vm898 = vcmp.eq.s32.totalorder %v856, %v775
        %vm899 = vcmp.eq.s32.totalorder %v859, %v775
        %vm900 = vcmp.eq.s32.totalorder %v862, %v775
        %vm901 = vcmp.eq.s32.totalorder %v865, %v775
        %vm902 = vcmp.eq.s32.totalorder %v868, %v775
        %vm903 = vcmp.eq.s32.totalorder %v871, %v775
        %v904 = vsel %vm872, 1.0, 0.0
        %v905 = vsel %vm873, 1.0, 0.0
        %v906 = vsel %vm874, 1.0, 0.0
        %v907 = vsel %vm875, 1.0, 0.0
        %v908 = vsel %vm876, 1.0, 0.0
        %v909 = vsel %vm877, 1.0, 0.0
        %v910 = vsel %vm878, 1.0, 0.0
        %v911 = vsel %vm879, 1.0, 0.0
        %v912 = vsel %vm880, 1.0, 0.0
        %v913 = vsel %vm881, 1.0, 0.0
        %v914 = vsel %vm882, 1.0, 0.0
        %v915 = vsel %vm883, 1.0, 0.0
        %v916 = vsel %vm884, 1.0, 0.0
        %v917 = vsel %vm885, 1.0, 0.0
        %v918 = vsel %vm886, 1.0, 0.0
        %v919 = vsel %vm887, 1.0, 0.0
        %v920 = vsel %vm888, 1.0, 0.0
        %v921 = vsel %vm889, 1.0, 0.0
        %v922 = vsel %vm890, 1.0, 0.0
        %v923 = vsel %vm891, 1.0, 0.0
        %v924 = vsel %vm892, 1.0, 0.0
        %v925 = vsel %vm893, 1.0, 0.0
        %v926 = vsel %vm894, 1.0, 0.0
        %v927 = vsel %vm895, 1.0, 0.0
        %v928 = vsel %vm896, 1.0, 0.0
        %v929 = vsel %vm897, 1.0, 0.0
        %v930 = vsel %vm898, 1.0, 0.0
        %v931 = vsel %vm899, 1.0, 0.0
        %v932 = vsel %vm900, 1.0, 0.0
        %v933 = vsel %vm901, 1.0, 0.0
        %v934 = vsel %vm902, 1.0, 0.0
        %v935 = vsel %vm903, 1.0, 0.0
        %v936 = vpack.c.bf16 %v905, %v904
        %v937 = vpack.c.bf16 %v907, %v906
        %v938 = vpack.c.bf16 %v909, %v908
        %v939 = vpack.c.bf16 %v911, %v910
        %v940 = vpack.c.bf16 %v913, %v912
        %v941 = vpack.c.bf16 %v915, %v914
        %v942 = vpack.c.bf16 %v917, %v916
        %v943 = vpack.c.bf16 %v919, %v918
        %v944 = vpack.c.bf16 %v921, %v920
        %v945 = vpack.c.bf16 %v923, %v922
        %v946 = vpack.c.bf16 %v925, %v924
        %v947 = vpack.c.bf16 %v927, %v926
        %v948 = vpack.c.bf16 %v929, %v928
        %v949 = vpack.c.bf16 %v931, %v930
        %v950 = vpack.c.bf16 %v933, %v932
        %v951 = vpack.c.bf16 %v935, %v934
        %v952 = vld [vmem:[%s2] sm:$0xf]
        %v953 = vld [vmem:[%s2 + $0x4] sm:$0xf]
        %v954 = vld [vmem:[%s2 + $0x8] sm:$0xf]
        %v955 = vld [vmem:[%s2 + $0xc] sm:$0xf]
        %v956 = vld [vmem:[%s2 + $0x10] sm:$0xf]
        %v957 = vld [vmem:[%s2 + $0x14] sm:$0xf]
        %v958 = vld [vmem:[%s2 + $0x18] sm:$0xf]
        %v959 = vld [vmem:[%s2 + $0x1c] sm:$0xf]
        %v968 = vunpack.c.l.b16 %v952
        %v969 = vunpack.c.l.b16 %v953
        %v970 = vunpack.c.l.b16 %v954
        %v971 = vunpack.c.l.b16 %v955
        %v972 = vunpack.c.l.b16 %v956
        %v973 = vunpack.c.l.b16 %v957
        %v974 = vunpack.c.l.b16 %v958
        %v975 = vunpack.c.l.b16 %v959
        %v976 = vpack.c.b16 %v969, %v968
        %v977 = vpack.c.b16 %v971, %v970
        %v978 = vpack.c.b16 %v973, %v972
        %v979 = vpack.c.b16 %v975, %v974
        %vm984 = vcmask 523264
        %v986 = vsel %vm984, %v936, 0
        %v989 = vsel %vm984, %v937, 0
        %v992 = vsel %vm984, %v938, 0
        %v995 = vsel %vm984, %v939, 0
        %v998 = vsel %vm984, %v940, 0
        %v1001 = vsel %vm984, %v941, 0
        %v1004 = vsel %vm984, %v942, 0
        %v1007 = vsel %vm984, %v943, 0
        %v1010 = vsel %vm984, %v944, 0
        %v1013 = vsel %vm984, %v945, 0
        %v1016 = vsel %vm984, %v946, 0
        %v1019 = vsel %vm984, %v947, 0
        %v1022 = vsel %vm984, %v948, 0
        %v1025 = vsel %vm984, %v949, 0
        %v1028 = vsel %vm984, %v950, 0
        %v1031 = vsel %vm984, %v951, 0
        %1033 = vmatprep.subr.bf16.mxu0 0
        %1034 = vmatpush1.bf16.msra.mxu0 %v976
        %1035 = vmatprep.subr.bf16.mxu0 0
        %1036 = vmatpush1.bf16.msra.mxu0 %v977
        %1037 = vmatprep.subr.bf16.mxu0 0
        %1038 = vmatpush1.bf16.msra.mxu0 %v978
        %1039 = vmatprep.subr.bf16.mxu0 0
        %1040 = vmatpush1.bf16.msra.mxu0 %v979
        %1041 = vmatprep.subr.bf16.mxu0 0
        %1042 = vmatpush1.bf16.msra.mxu0 0
        %1043 = vmatprep.subr.bf16.mxu0 0
        %1044 = vmatpush1.bf16.msra.mxu0 0
        %1045 = vmatprep.subr.bf16.mxu0 0
        %1046 = vmatpush1.bf16.msra.mxu0 0
        %1047 = vmatprep.subr.bf16.mxu0 0
        %1048 = vmatpush1.bf16.msra.mxu0 0
        %1049 = vmatprep.subr.bf16.mxu0 0
        %1050 = vmatpush1.bf16.msra.mxu0 0
        %1051 = vmatprep.subr.bf16.mxu0 0
        %1052 = vmatpush1.bf16.msra.mxu0 0
        %1053 = vmatprep.subr.bf16.mxu0 0
        %1054 = vmatpush1.bf16.msra.mxu0 0
        %1055 = vmatprep.subr.bf16.mxu0 0
        %1056 = vmatpush1.bf16.msra.mxu0 0
        %1057 = vmatprep.subr.bf16.mxu0 0
        %1058 = vmatpush1.bf16.msra.mxu0 0
        %1059 = vmatprep.subr.bf16.mxu0 0
        %1060 = vmatpush1.bf16.msra.mxu0 0
        %1061 = vmatprep.subr.bf16.mxu0 0
        %1062 = vmatpush1.bf16.msra.mxu0 0
        %1063 = vmatprep.subr.bf16.mxu0 0
        %1064 = vmatpush1.bf16.msra.mxu0 0
        %1065 = vmatprep.mubr.bf16.mxu0 0
        %1066 = vmatmul.mubr.bf16.gmra.mrb[0].mxu0 %v986
        %v1067 = vpop.f32.mrb[0].mxu0
        %v1068 = vadd.f32 0.0, %v1067
        %v1069 = vpop.f32.mrb[0].mxu0
        %v1070 = vpop.f32.mrb[0].mxu0
        %v1071 = vadd.f32 0.0, %v1070
        %v1072 = vpop.f32.mrb[0].mxu0
        %1073 = vmatprep.mubr.bf16.mxu0 0
        %1074 = vmatmul.mubr.bf16.gmra.mrb[0].mxu0 %v989
        %v1075 = vpop.f32.mrb[0].mxu0
        %v1076 = vadd.f32 0.0, %v1075
        %v1077 = vpop.f32.mrb[0].mxu0
        %v1078 = vpop.f32.mrb[0].mxu0
        %v1079 = vadd.f32 0.0, %v1078
        %v1080 = vpop.f32.mrb[0].mxu0
        %1081 = vmatprep.mubr.bf16.mxu0 0
        %1082 = vmatmul.mubr.bf16.gmra.mrb[0].mxu0 %v992
        %v1083 = vpop.f32.mrb[0].mxu0
        %v1084 = vadd.f32 0.0, %v1083
        %v1085 = vpop.f32.mrb[0].mxu0
        %v1086 = vpop.f32.mrb[0].mxu0
        %v1087 = vadd.f32 0.0, %v1086
        %v1088 = vpop.f32.mrb[0].mxu0
        %1089 = vmatprep.mubr.bf16.mxu0 0
        %1090 = vmatmul.mubr.bf16.gmra.mrb[0].mxu0 %v995
        %v1091 = vpop.f32.mrb[0].mxu0
        %v1092 = vadd.f32 0.0, %v1091
        %v1093 = vpop.f32.mrb[0].mxu0
        %v1094 = vpop.f32.mrb[0].mxu0
        %v1095 = vadd.f32 0.0, %v1094
        %v1096 = vpop.f32.mrb[0].mxu0
        %1097 = vmatprep.mubr.bf16.mxu0 0
        %1098 = vmatmul.mubr.bf16.gmra.mrb[0].mxu0 %v998
        %v1099 = vpop.f32.mrb[0].mxu0
        %v1100 = vadd.f32 0.0, %v1099
        %v1101 = vpop.f32.mrb[0].mxu0
        %v1102 = vpop.f32.mrb[0].mxu0
        %v1103 = vadd.f32 0.0, %v1102
        %v1104 = vpop.f32.mrb[0].mxu0
        %1105 = vmatprep.mubr.bf16.mxu0 0
        %1106 = vmatmul.mubr.bf16.gmra.mrb[0].mxu0 %v1001
        %v1107 = vpop.f32.mrb[0].mxu0
        %v1108 = vadd.f32 0.0, %v1107
        %v1109 = vpop.f32.mrb[0].mxu0
        %v1110 = vpop.f32.mrb[0].mxu0
        %v1111 = vadd.f32 0.0, %v1110
        %v1112 = vpop.f32.mrb[0].mxu0
        %1113 = vmatprep.mubr.bf16.mxu0 0
        %1114 = vmatmul.mubr.bf16.gmra.mrb[0].mxu0 %v1004
        %v1115 = vpop.f32.mrb[0].mxu0
        %v1116 = vadd.f32 0.0, %v1115
        %v1117 = vpop.f32.mrb[0].mxu0
        %v1118 = vpop.f32.mrb[0].mxu0
        %v1119 = vadd.f32 0.0, %v1118
        %v1120 = vpop.f32.mrb[0].mxu0
        %1121 = vmatprep.mubr.bf16.mxu0 0
        %1122 = vmatmul.mubr.bf16.gmra.mrb[0].mxu0 %v1007
        %v1123 = vpop.f32.mrb[0].mxu0
        %v1124 = vadd.f32 0.0, %v1123
        %v1125 = vpop.f32.mrb[0].mxu0
        %v1126 = vpop.f32.mrb[0].mxu0
        %v1127 = vadd.f32 0.0, %v1126
        %v1128 = vpop.f32.mrb[0].mxu0
        %1129 = vmatprep.mubr.bf16.mxu0 0
        %1130 = vmatmul.mubr.bf16.gmra.mrb[0].mxu0 %v1010
        %v1131 = vpop.f32.mrb[0].mxu0
        %v1132 = vadd.f32 0.0, %v1131
        %v1133 = vpop.f32.mrb[0].mxu0
        %v1134 = vpop.f32.mrb[0].mxu0
        %v1135 = vadd.f32 0.0, %v1134
        %v1136 = vpop.f32.mrb[0].mxu0
        %1137 = vmatprep.mubr.bf16.mxu0 0
        %1138 = vmatmul.mubr.bf16.gmra.mrb[0].mxu0 %v1013
        %v1139 = vpop.f32.mrb[0].mxu0
        %v1140 = vadd.f32 0.0, %v1139
        %v1141 = vpop.f32.mrb[0].mxu0
        %v1142 = vpop.f32.mrb[0].mxu0
        %v1143 = vadd.f32 0.0, %v1142
        %v1144 = vpop.f32.mrb[0].mxu0
        %1145 = vmatprep.mubr.bf16.mxu0 0
        %1146 = vmatmul.mubr.bf16.gmra.mrb[0].mxu0 %v1016
        %v1147 = vpop.f32.mrb[0].mxu0
        %v1148 = vadd.f32 0.0, %v1147
        %v1149 = vpop.f32.mrb[0].mxu0
        %v1150 = vpop.f32.mrb[0].mxu0
        %v1151 = vadd.f32 0.0, %v1150
        %v1152 = vpop.f32.mrb[0].mxu0
        %1153 = vmatprep.mubr.bf16.mxu0 0
        %1154 = vmatmul.mubr.bf16.gmra.mrb[0].mxu0 %v1019
        %v1155 = vpop.f32.mrb[0].mxu0
        %v1156 = vadd.f32 0.0, %v1155
        %v1157 = vpop.f32.mrb[0].mxu0
        %v1158 = vpop.f32.mrb[0].mxu0
        %v1159 = vadd.f32 0.0, %v1158
        %v1160 = vpop.f32.mrb[0].mxu0
        %1161 = vmatprep.mubr.bf16.mxu0 0
        %1162 = vmatmul.mubr.bf16.gmra.mrb[0].mxu0 %v1022
        %v1163 = vpop.f32.mrb[0].mxu0
        %v1164 = vadd.f32 0.0, %v1163
        %v1165 = vpop.f32.mrb[0].mxu0
        %v1166 = vpop.f32.mrb[0].mxu0
        %v1167 = vadd.f32 0.0, %v1166
        %v1168 = vpop.f32.mrb[0].mxu0
        %1169 = vmatprep.mubr.bf16.mxu0 0
        %1170 = vmatmul.mubr.bf16.gmra.mrb[0].mxu0 %v1025
        %v1171 = vpop.f32.mrb[0].mxu0
        %v1172 = vadd.f32 0.0, %v1171
        %v1173 = vpop.f32.mrb[0].mxu0
        %v1174 = vpop.f32.mrb[0].mxu0
        %v1175 = vadd.f32 0.0, %v1174
        %v1176 = vpop.f32.mrb[0].mxu0
        %1177 = vmatprep.mubr.bf16.mxu0 0
        %1178 = vmatmul.mubr.bf16.gmra.mrb[0].mxu0 %v1028
        %v1179 = vpop.f32.mrb[0].mxu0
        %v1180 = vadd.f32 0.0, %v1179
        %v1181 = vpop.f32.mrb[0].mxu0
        %v1182 = vpop.f32.mrb[0].mxu0
        %v1183 = vadd.f32 0.0, %v1182
        %v1184 = vpop.f32.mrb[0].mxu0
        %1185 = vmatprep.mubr.bf16.mxu0 0
        %1186 = vmatmul.mubr.bf16.gmra.mrb[0].mxu0 %v1031
        %v1187 = vpop.f32.mrb[0].mxu0
        %v1188 = vadd.f32 0.0, %v1187
        %v1189 = vpop.f32.mrb[0].mxu0
        %v1190 = vpop.f32.mrb[0].mxu0
        %v1191 = vadd.f32 0.0, %v1190
        %v1192 = vpop.f32.mrb[0].mxu0
        %1193 = vdwg.mxu0
        %v1194 = vld [vmem:[%s5] sm:$0x1]
        %v1195 = vld [vmem:[%s386] sm:$0x1]
        %v1196 = vadd.f32 %v1195, %v1194
        %v1197 = vadd.f32 %v616, %v1068
        %v1198 = vadd.f32 %v619, %v1071
        %v1199 = vadd.f32 %v624, %v1076
        %v1200 = vadd.f32 %v632, %v1084
        %v1201 = vadd.f32 %v635, %v1087
        %v1202 = vadd.f32 %v640, %v1092
        %v1203 = vadd.f32 %v648, %v1100
        %v1204 = vadd.f32 %v651, %v1103
        %v1205 = vadd.f32 %v656, %v1108
        %v1206 = vadd.f32 %v664, %v1116
        %v1207 = vadd.f32 %v667, %v1119
        %v1208 = vadd.f32 %v672, %v1124
        %v1209 = vadd.f32 %v680, %v1132
        %v1210 = vadd.f32 %v683, %v1135
        %v1211 = vadd.f32 %v688, %v1140
        %v1212 = vadd.f32 %v696, %v1148
        %v1213 = vadd.f32 %v699, %v1151
        %v1214 = vadd.f32 %v704, %v1156
        %v1215 = vadd.f32 %v712, %v1164
        %v1216 = vadd.f32 %v715, %v1167
        %v1217 = vadd.f32 %v720, %v1172
        %v1218 = vadd.f32 %v728, %v1180
        %v1219 = vadd.f32 %v731, %v1183
        %v1220 = vadd.f32 %v736, %v1188
        %v1222 = vlaneseq
        %v1223 = vshrl.u32 %v1222, 7
        %v1224 = vsub.s32 0, %v1223
        %v1225 = vrot.slane %v1194, %v1224
        %v1227 = vadd.f32 %v1197, %v1225
        %v1228 = vadd.f32 %v1198, %v1225
        %v1229 = vadd.f32 %v1199, %v1225
        %v1230 = vadd.f32 %v1200, %v1225
        %v1231 = vadd.f32 %v1201, %v1225
        %v1232 = vadd.f32 %v1202, %v1225
        %v1233 = vadd.f32 %v1203, %v1225
        %v1234 = vadd.f32 %v1204, %v1225
        %v1235 = vadd.f32 %v1205, %v1225
        %v1236 = vadd.f32 %v1206, %v1225
        %v1237 = vadd.f32 %v1207, %v1225
        %v1238 = vadd.f32 %v1208, %v1225
        %v1239 = vadd.f32 %v1209, %v1225
        %v1240 = vadd.f32 %v1210, %v1225
        %v1241 = vadd.f32 %v1211, %v1225
        %v1242 = vadd.f32 %v1212, %v1225
        %v1243 = vadd.f32 %v1213, %v1225
        %v1244 = vadd.f32 %v1214, %v1225
        %v1245 = vadd.f32 %v1215, %v1225
        %v1246 = vadd.f32 %v1216, %v1225
        %v1247 = vadd.f32 %v1217, %v1225
        %v1248 = vadd.f32 %v1218, %v1225
        %v1249 = vadd.f32 %v1219, %v1225
        %v1250 = vadd.f32 %v1220, %v1225
        %v1251 = vmul.f32 %v1227, %v1227
        %v1252 = vmul.f32 %v1228, %v1228
        %v1253 = vmul.f32 %v1229, %v1229
        %v1254 = vmul.f32 %v1230, %v1230
        %v1255 = vmul.f32 %v1231, %v1231
        %v1256 = vmul.f32 %v1232, %v1232
        %v1257 = vmul.f32 %v1233, %v1233
        %v1258 = vmul.f32 %v1234, %v1234
        %v1259 = vmul.f32 %v1235, %v1235
        %v1260 = vmul.f32 %v1236, %v1236
        %v1261 = vmul.f32 %v1237, %v1237
        %v1262 = vmul.f32 %v1238, %v1238
        %v1263 = vmul.f32 %v1239, %v1239
        %v1264 = vmul.f32 %v1240, %v1240
        %v1265 = vmul.f32 %v1241, %v1241
        %v1266 = vmul.f32 %v1242, %v1242
        %v1267 = vmul.f32 %v1243, %v1243
        %v1268 = vmul.f32 %v1244, %v1244
        %v1269 = vmul.f32 %v1245, %v1245
        %v1270 = vmul.f32 %v1246, %v1246
        %v1271 = vmul.f32 %v1247, %v1247
        %v1272 = vmul.f32 %v1248, %v1248
        %v1273 = vmul.f32 %v1249, %v1249
        %v1274 = vmul.f32 %v1250, %v1250
        %v1275 = vmul.f32 %v1227, %v1251
        %v1276 = vmul.f32 %v1228, %v1252
        %v1277 = vmul.f32 %v1229, %v1253
        %v1278 = vmul.f32 %v1230, %v1254
        %v1279 = vmul.f32 %v1231, %v1255
        %v1280 = vmul.f32 %v1232, %v1256
        %v1281 = vmul.f32 %v1233, %v1257
        %v1282 = vmul.f32 %v1234, %v1258
        %v1283 = vmul.f32 %v1235, %v1259
        %v1284 = vmul.f32 %v1236, %v1260
        %v1285 = vmul.f32 %v1237, %v1261
        %v1286 = vmul.f32 %v1238, %v1262
        %v1287 = vmul.f32 %v1239, %v1263
        %v1288 = vmul.f32 %v1240, %v1264
        %v1289 = vmul.f32 %v1241, %v1265
        %v1290 = vmul.f32 %v1242, %v1266
        %v1291 = vmul.f32 %v1243, %v1267
        %v1292 = vmul.f32 %v1244, %v1268
        %v1293 = vmul.f32 %v1245, %v1269
        %v1294 = vmul.f32 %v1246, %v1270
        %v1295 = vmul.f32 %v1247, %v1271
        %v1296 = vmul.f32 %v1248, %v1272
        %v1297 = vmul.f32 %v1249, %v1273
        %v1298 = vmul.f32 %v1250, %v1274
        %v1299 = vmul.f32 %v1275, 0.044715
        %v1300 = vmul.f32 %v1276, 0.044715
        %v1301 = vmul.f32 %v1277, 0.044715
        %v1302 = vmul.f32 %v1278, 0.044715
        %v1303 = vmul.f32 %v1279, 0.044715
        %v1304 = vmul.f32 %v1280, 0.044715
        %v1305 = vmul.f32 %v1281, 0.044715
        %v1306 = vmul.f32 %v1282, 0.044715
        %v1307 = vmul.f32 %v1283, 0.044715
        %v1308 = vmul.f32 %v1284, 0.044715
        %v1309 = vmul.f32 %v1285, 0.044715
        %v1310 = vmul.f32 %v1286, 0.044715
        %v1311 = vmul.f32 %v1287, 0.044715
        %v1312 = vmul.f32 %v1288, 0.044715
        %v1313 = vmul.f32 %v1289, 0.044715
        %v1314 = vmul.f32 %v1290, 0.044715
        %v1315 = vmul.f32 %v1291, 0.044715
        %v1316 = vmul.f32 %v1292, 0.044715
        %v1317 = vmul.f32 %v1293, 0.044715
        %v1318 = vmul.f32 %v1294, 0.044715
        %v1319 = vmul.f32 %v1295, 0.044715
        %v1320 = vmul.f32 %v1296, 0.044715
        %v1321 = vmul.f32 %v1297, 0.044715
        %v1322 = vmul.f32 %v1298, 0.044715
        %v1323 = vadd.f32 %v1227, %v1299
        %v1324 = vadd.f32 %v1228, %v1300
        %v1325 = vadd.f32 %v1229, %v1301
        %v1326 = vadd.f32 %v1230, %v1302
        %v1327 = vadd.f32 %v1231, %v1303
        %v1328 = vadd.f32 %v1232, %v1304
        %v1329 = vadd.f32 %v1233, %v1305
        %v1330 = vadd.f32 %v1234, %v1306
        %v1331 = vadd.f32 %v1235, %v1307
        %v1332 = vadd.f32 %v1236, %v1308
        %v1333 = vadd.f32 %v1237, %v1309
        %v1334 = vadd.f32 %v1238, %v1310
        %v1335 = vadd.f32 %v1239, %v1311
        %v1336 = vadd.f32 %v1240, %v1312
        %v1337 = vadd.f32 %v1241, %v1313
        %v1338 = vadd.f32 %v1242, %v1314
        %v1339 = vadd.f32 %v1243, %v1315
        %v1340 = vadd.f32 %v1244, %v1316
        %v1341 = vadd.f32 %v1245, %v1317
        %v1342 = vadd.f32 %v1246, %v1318
        %v1343 = vadd.f32 %v1247, %v1319
        %v1344 = vadd.f32 %v1248, %v1320
        %v1345 = vadd.f32 %v1249, %v1321
        %v1346 = vadd.f32 %v1250, %v1322
        %v1347 = vmul.f32 %v1323, 0.7978846
        %v1348 = vmul.f32 %v1324, 0.7978846
        %v1349 = vmul.f32 %v1325, 0.7978846
        %v1350 = vmul.f32 %v1326, 0.7978846
        %v1351 = vmul.f32 %v1327, 0.7978846
        %v1352 = vmul.f32 %v1328, 0.7978846
        %v1353 = vmul.f32 %v1329, 0.7978846
        %v1354 = vmul.f32 %v1330, 0.7978846
        %v1355 = vmul.f32 %v1331, 0.7978846
        %v1356 = vmul.f32 %v1332, 0.7978846
        %v1357 = vmul.f32 %v1333, 0.7978846
        %v1358 = vmul.f32 %v1334, 0.7978846
        %v1359 = vmul.f32 %v1335, 0.7978846
        %v1360 = vmul.f32 %v1336, 0.7978846
        %v1361 = vmul.f32 %v1337, 0.7978846
        %v1362 = vmul.f32 %v1338, 0.7978846
        %v1363 = vmul.f32 %v1339, 0.7978846
        %v1364 = vmul.f32 %v1340, 0.7978846
        %v1365 = vmul.f32 %v1341, 0.7978846
        %v1366 = vmul.f32 %v1342, 0.7978846
        %v1367 = vmul.f32 %v1343, 0.7978846
        %v1368 = vmul.f32 %v1344, 0.7978846
        %v1369 = vmul.f32 %v1345, 0.7978846
        %v1370 = vmul.f32 %v1346, 0.7978846
        %v1371 = vtanh.pop %v1347
        %v1372 = vtanh.pop %v1348
        %v1373 = vtanh.pop %v1349
        %v1374 = vtanh.pop %v1350
        %v1375 = vtanh.pop %v1351
        %v1376 = vtanh.pop %v1352
        %v1377 = vtanh.pop %v1353
        %v1378 = vtanh.pop %v1354
        %v1379 = vtanh.pop %v1355
        %v1380 = vtanh.pop %v1356
        %v1381 = vtanh.pop %v1357
        %v1382 = vtanh.pop %v1358
        %v1383 = vtanh.pop %v1359
        %v1384 = vtanh.pop %v1360
        %v1385 = vtanh.pop %v1361
        %v1386 = vtanh.pop %v1362
        %v1387 = vtanh.pop %v1363
        %v1388 = vtanh.pop %v1364
        %v1389 = vtanh.pop %v1365
        %v1390 = vtanh.pop %v1366
        %v1391 = vtanh.pop %v1367
        %v1392 = vtanh.pop %v1368
        %v1393 = vtanh.pop %v1369
        %v1394 = vtanh.pop %v1370
        %v1395 = vadd.f32 %v1371, 1.0
        %v1396 = vadd.f32 %v1372, 1.0
        %v1397 = vadd.f32 %v1373, 1.0
        %v1398 = vadd.f32 %v1374, 1.0
        %v1399 = vadd.f32 %v1375, 1.0
        %v1400 = vadd.f32 %v1376, 1.0
        %v1401 = vadd.f32 %v1377, 1.0
        %v1402 = vadd.f32 %v1378, 1.0
        %v1403 = vadd.f32 %v1379, 1.0
        %v1404 = vadd.f32 %v1380, 1.0
        %v1405 = vadd.f32 %v1381, 1.0
        %v1406 = vadd.f32 %v1382, 1.0
        %v1407 = vadd.f32 %v1383, 1.0
        %v1408 = vadd.f32 %v1384, 1.0
        %v1409 = vadd.f32 %v1385, 1.0
        %v1410 = vadd.f32 %v1386, 1.0
        %v1411 = vadd.f32 %v1387, 1.0
        %v1412 = vadd.f32 %v1388, 1.0
        %v1413 = vadd.f32 %v1389, 1.0
        %v1414 = vadd.f32 %v1390, 1.0
        %v1415 = vadd.f32 %v1391, 1.0
        %v1416 = vadd.f32 %v1392, 1.0
        %v1417 = vadd.f32 %v1393, 1.0
        %v1418 = vadd.f32 %v1394, 1.0
        %v1419 = vmul.f32 %v1395, 0.5
        %v1420 = vmul.f32 %v1396, 0.5
        %v1421 = vmul.f32 %v1397, 0.5
        %v1422 = vmul.f32 %v1398, 0.5
        %v1423 = vmul.f32 %v1399, 0.5
        %v1424 = vmul.f32 %v1400, 0.5
        %v1425 = vmul.f32 %v1401, 0.5
        %v1426 = vmul.f32 %v1402, 0.5
        %v1427 = vmul.f32 %v1403, 0.5
        %v1428 = vmul.f32 %v1404, 0.5
        %v1429 = vmul.f32 %v1405, 0.5
        %v1430 = vmul.f32 %v1406, 0.5
        %v1431 = vmul.f32 %v1407, 0.5
        %v1432 = vmul.f32 %v1408, 0.5
        %v1433 = vmul.f32 %v1409, 0.5
        %v1434 = vmul.f32 %v1410, 0.5
        %v1435 = vmul.f32 %v1411, 0.5
        %v1436 = vmul.f32 %v1412, 0.5
        %v1437 = vmul.f32 %v1413, 0.5
        %v1438 = vmul.f32 %v1414, 0.5
        %v1439 = vmul.f32 %v1415, 0.5
        %v1440 = vmul.f32 %v1416, 0.5
        %v1441 = vmul.f32 %v1417, 0.5
        %v1442 = vmul.f32 %v1418, 0.5
        %v1443 = vmul.f32 %v1227, %v1419
        %v1444 = vmul.f32 %v1228, %v1420
        %v1445 = vmul.f32 %v1229, %v1421
        %v1446 = vmul.f32 %v1230, %v1422
        %v1447 = vmul.f32 %v1231, %v1423
        %v1448 = vmul.f32 %v1232, %v1424
        %v1449 = vmul.f32 %v1233, %v1425
        %v1450 = vmul.f32 %v1234, %v1426
        %v1451 = vmul.f32 %v1235, %v1427
        %v1452 = vmul.f32 %v1236, %v1428
        %v1453 = vmul.f32 %v1237, %v1429
        %v1454 = vmul.f32 %v1238, %v1430
        %v1455 = vmul.f32 %v1239, %v1431
        %v1456 = vmul.f32 %v1240, %v1432
        %v1457 = vmul.f32 %v1241, %v1433
        %v1458 = vmul.f32 %v1242, %v1434
        %v1459 = vmul.f32 %v1243, %v1435
        %v1460 = vmul.f32 %v1244, %v1436
        %v1461 = vmul.f32 %v1245, %v1437
        %v1462 = vmul.f32 %v1246, %v1438
        %v1463 = vmul.f32 %v1247, %v1439
        %v1464 = vmul.f32 %v1248, %v1440
        %v1465 = vmul.f32 %v1249, %v1441
        %v1466 = vmul.f32 %v1250, %v1442
        %v1467 = vadd.f32 %v1443, %v1444
        %v1468 = vadd.f32 %v1467, %v1445
        %v1469 = vrot.slane %v1468, 4
        %v1470 = vadd.f32 %v1468, %v1469
        %v1471 = vrot.slane %v1470, 2
        %v1472 = vadd.f32 %v1470, %v1471
        %v1473 = vrot.slane %v1472, 1
        %v1474 = vadd.f32 %v1472, %v1473
        %v1475 = vadd.f32 %v1446, %v1447
        %v1476 = vadd.f32 %v1475, %v1448
        %v1477 = vrot.slane %v1476, 4
        %v1478 = vadd.f32 %v1476, %v1477
        %v1479 = vrot.slane %v1478, 2
        %v1480 = vadd.f32 %v1478, %v1479
        %v1481 = vrot.slane %v1480, 1
        %v1482 = vadd.f32 %v1480, %v1481
        %v1483 = vadd.f32 %v1449, %v1450
        %v1484 = vadd.f32 %v1483, %v1451
        %v1485 = vrot.slane %v1484, 4
        %v1486 = vadd.f32 %v1484, %v1485
        %v1487 = vrot.slane %v1486, 2
        %v1488 = vadd.f32 %v1486, %v1487
        %v1489 = vrot.slane %v1488, 1
        %v1490 = vadd.f32 %v1488, %v1489
        %v1491 = vadd.f32 %v1452, %v1453
        %v1492 = vadd.f32 %v1491, %v1454
        %v1493 = vrot.slane %v1492, 4
        %v1494 = vadd.f32 %v1492, %v1493
        %v1495 = vrot.slane %v1494, 2
        %v1496 = vadd.f32 %v1494, %v1495
        %v1497 = vrot.slane %v1496, 1
        %v1498 = vadd.f32 %v1496, %v1497
        %v1499 = vadd.f32 %v1455, %v1456
        %v1500 = vadd.f32 %v1499, %v1457
        %v1501 = vrot.slane %v1500, 4
        %v1502 = vadd.f32 %v1500, %v1501
        %v1503 = vrot.slane %v1502, 2
        %v1504 = vadd.f32 %v1502, %v1503
        %v1505 = vrot.slane %v1504, 1
        %v1506 = vadd.f32 %v1504, %v1505
        %v1507 = vadd.f32 %v1458, %v1459
        %v1508 = vadd.f32 %v1507, %v1460
        %v1509 = vrot.slane %v1508, 4
        %v1510 = vadd.f32 %v1508, %v1509
        %v1511 = vrot.slane %v1510, 2
        %v1512 = vadd.f32 %v1510, %v1511
        %v1513 = vrot.slane %v1512, 1
        %v1514 = vadd.f32 %v1512, %v1513
        %v1515 = vadd.f32 %v1461, %v1462
        %v1516 = vadd.f32 %v1515, %v1463
        %v1517 = vrot.slane %v1516, 4
        %v1518 = vadd.f32 %v1516, %v1517
        %v1519 = vrot.slane %v1518, 2
        %v1520 = vadd.f32 %v1518, %v1519
        %v1521 = vrot.slane %v1520, 1
        %v1522 = vadd.f32 %v1520, %v1521
        %v1523 = vadd.f32 %v1464, %v1465
        %v1524 = vadd.f32 %v1523, %v1466
        %v1525 = vrot.slane %v1524, 4
        %v1526 = vadd.f32 %v1524, %v1525
        %v1527 = vrot.slane %v1526, 2
        %v1528 = vadd.f32 %v1526, %v1527
        %v1529 = vrot.slane %v1528, 1
        %v1530 = vadd.f32 %v1528, %v1529
        %v1531 = vrcp.pop 24.0
        %v1532 = vmul.f32 %v1474, %v1531
        %v1533 = vmul.f32 %v1482, %v1531
        %v1534 = vmul.f32 %v1490, %v1531
        %v1535 = vmul.f32 %v1498, %v1531
        %v1536 = vmul.f32 %v1506, %v1531
        %v1537 = vmul.f32 %v1514, %v1531
        %v1538 = vmul.f32 %v1522, %v1531
        %v1539 = vmul.f32 %v1530, %v1531
        %v1540 = vadd.f32 %v1532, %v1079
        %v1541 = vadd.f32 %v1533, %v1095
        %v1542 = vadd.f32 %v1534, %v1111
        %v1543 = vadd.f32 %v1535, %v1127
        %v1544 = vadd.f32 %v1536, %v1143
        %v1545 = vadd.f32 %v1537, %v1159
        %v1546 = vadd.f32 %v1538, %v1175
        %v1547 = vadd.f32 %v1539, %v1191
        %v1549 = vlaneseq
        %v1550 = vshrl.u32 %v1549, 7
        %v1551 = vsub.s32 0, %v1550
        %v1552 = vrot.slane %v1196, %v1551
        %v1554 = vadd.f32 %v1540, %v1552
        %v1555 = vadd.f32 %v1541, %v1552
        %v1556 = vadd.f32 %v1542, %v1552
        %v1557 = vadd.f32 %v1543, %v1552
        %v1558 = vadd.f32 %v1544, %v1552
        %v1559 = vadd.f32 %v1545, %v1552
        %v1560 = vadd.f32 %v1546, %v1552
        %v1561 = vadd.f32 %v1547, %v1552
        %v1562 = vmul.f32 %v627, 0.5
        %v1563 = vmul.f32 %v643, 0.5
        %v1564 = vmul.f32 %v659, 0.5
        %v1565 = vmul.f32 %v675, 0.5
        %v1566 = vmul.f32 %v691, 0.5
        %v1567 = vmul.f32 %v707, 0.5
        %v1568 = vmul.f32 %v723, 0.5
        %v1569 = vmul.f32 %v739, 0.5
        %v1570 = vadd.f32 %v1554, %v1562
        %v1571 = vadd.f32 %v1555, %v1563
        %v1572 = vadd.f32 %v1556, %v1564
        %v1573 = vadd.f32 %v1557, %v1565
        %v1574 = vadd.f32 %v1558, %v1566
        %v1575 = vadd.f32 %v1559, %v1567
        %v1576 = vadd.f32 %v1560, %v1568
        %v1577 = vadd.f32 %v1561, %v1569
        %v1578 = vmul.f32 %v1570, %v1570
        %v1579 = vmul.f32 %v1571, %v1571
        %v1580 = vmul.f32 %v1572, %v1572
        %v1581 = vmul.f32 %v1573, %v1573
        %v1582 = vmul.f32 %v1574, %v1574
        %v1583 = vmul.f32 %v1575, %v1575
        %v1584 = vmul.f32 %v1576, %v1576
        %v1585 = vmul.f32 %v1577, %v1577
        %v1586 = vmul.f32 %v1570, %v1578
        %v1587 = vmul.f32 %v1571, %v1579
        %v1588 = vmul.f32 %v1572, %v1580
        %v1589 = vmul.f32 %v1573, %v1581
        %v1590 = vmul.f32 %v1574, %v1582
        %v1591 = vmul.f32 %v1575, %v1583
        %v1592 = vmul.f32 %v1576, %v1584
        %v1593 = vmul.f32 %v1577, %v1585
        %v1594 = vmul.f32 %v1586, 0.044715
        %v1595 = vmul.f32 %v1587, 0.044715
        %v1596 = vmul.f32 %v1588, 0.044715
        %v1597 = vmul.f32 %v1589, 0.044715
        %v1598 = vmul.f32 %v1590, 0.044715
        %v1599 = vmul.f32 %v1591, 0.044715
        %v1600 = vmul.f32 %v1592, 0.044715
        %v1601 = vmul.f32 %v1593, 0.044715
        %v1602 = vadd.f32 %v1570, %v1594
        %v1603 = vadd.f32 %v1571, %v1595
        %v1604 = vadd.f32 %v1572, %v1596
        %v1605 = vadd.f32 %v1573, %v1597
        %v1606 = vadd.f32 %v1574, %v1598
        %v1607 = vadd.f32 %v1575, %v1599
        %v1608 = vadd.f32 %v1576, %v1600
        %v1609 = vadd.f32 %v1577, %v1601
        %v1610 = vmul.f32 %v1602, 0.7978846
        %v1611 = vmul.f32 %v1603, 0.7978846
        %v1612 = vmul.f32 %v1604, 0.7978846
        %v1613 = vmul.f32 %v1605, 0.7978846
        %v1614 = vmul.f32 %v1606, 0.7978846
        %v1615 = vmul.f32 %v1607, 0.7978846
        %v1616 = vmul.f32 %v1608, 0.7978846
        %v1617 = vmul.f32 %v1609, 0.7978846
        %v1618 = vtanh.pop %v1610
        %v1619 = vtanh.pop %v1611
        %v1620 = vtanh.pop %v1612
        %v1621 = vtanh.pop %v1613
        %v1622 = vtanh.pop %v1614
        %v1623 = vtanh.pop %v1615
        %v1624 = vtanh.pop %v1616
        %v1625 = vtanh.pop %v1617
        %v1626 = vadd.f32 %v1618, 1.0
        %v1627 = vadd.f32 %v1619, 1.0
        %v1628 = vadd.f32 %v1620, 1.0
        %v1629 = vadd.f32 %v1621, 1.0
        %v1630 = vadd.f32 %v1622, 1.0
        %v1631 = vadd.f32 %v1623, 1.0
        %v1632 = vadd.f32 %v1624, 1.0
        %v1633 = vadd.f32 %v1625, 1.0
        %v1634 = vmul.f32 %v1626, 0.5
        %v1635 = vmul.f32 %v1627, 0.5
        %v1636 = vmul.f32 %v1628, 0.5
        %v1637 = vmul.f32 %v1629, 0.5
        %v1638 = vmul.f32 %v1630, 0.5
        %v1639 = vmul.f32 %v1631, 0.5
        %v1640 = vmul.f32 %v1632, 0.5
        %v1641 = vmul.f32 %v1633, 0.5
        %v1642 = vmul.f32 %v1570, %v1634
        %v1643 = vmul.f32 %v1571, %v1635
        %v1644 = vmul.f32 %v1572, %v1636
        %v1645 = vmul.f32 %v1573, %v1637
        %v1646 = vmul.f32 %v1574, %v1638
        %v1647 = vmul.f32 %v1575, %v1639
        %v1648 = vmul.f32 %v1576, %v1640
        %v1649 = vmul.f32 %v1577, %v1641
        %v1650 = vpack.c.bf16 %v1643, %v1642
        %v1651 = vpack.c.bf16 %v1645, %v1644
        %v1652 = vpack.c.bf16 %v1647, %v1646
        %v1653 = vpack.c.bf16 %v1649, %v1648
        %v1654 = vld [vmem:[%s6] sm:$0xf]
        %v1655 = vld [vmem:[%s6 + $0x4] sm:$0xf]
        %v1656 = vld [vmem:[%s6 + $0x8] sm:$0xf]
        %v1657 = vld [vmem:[%s6 + $0xc] sm:$0xf]
        %v1658 = vld [vmem:[%s6 + $0x10] sm:$0xf]
        %v1659 = vld [vmem:[%s6 + $0x14] sm:$0xf]
        %v1660 = vld [vmem:[%s6 + $0x18] sm:$0xf]
        %v1661 = vld [vmem:[%s6 + $0x1c] sm:$0xf]
        %v1662 = vld [vmem:[%s6 + $0x20] sm:$0xf]
        %v1663 = vld [vmem:[%s6 + $0x24] sm:$0xf]
        %v1664 = vld [vmem:[%s6 + $0x28] sm:$0xf]
        %v1665 = vld [vmem:[%s6 + $0x2c] sm:$0xf]
        %v1666 = vld [vmem:[%s6 + $0x30] sm:$0xf]
        %v1667 = vld [vmem:[%s6 + $0x34] sm:$0xf]
        %v1668 = vld [vmem:[%s6 + $0x38] sm:$0xf]
        %v1669 = vld [vmem:[%s6 + $0x3c] sm:$0xf]
        %v1670 = vld [vmem:[%s7] sm:$0x1]
        %v1672 = vlaneseq
        %v1673 = vshrl.u32 %v1672, 7
        %v1674 = vsub.s32 0, %v1673
        %v1675 = vrot.slane %v1670, %v1674
        %v1693 = vunpack.c.l.b16 %v1654
        %v1694 = vunpack.c.l.b16 %v1655
        %v1695 = vunpack.c.l.b16 %v1656
        %v1696 = vunpack.c.l.b16 %v1657
        %v1697 = vunpack.c.l.b16 %v1658
        %v1698 = vunpack.c.l.b16 %v1659
        %v1699 = vunpack.c.l.b16 %v1660
        %v1700 = vunpack.c.l.b16 %v1661
        %v1701 = vunpack.c.l.b16 %v1662
        %v1702 = vunpack.c.l.b16 %v1663
        %v1703 = vunpack.c.l.b16 %v1664
        %v1704 = vunpack.c.l.b16 %v1665
        %v1705 = vunpack.c.l.b16 %v1666
        %v1706 = vunpack.c.l.b16 %v1667
        %v1707 = vunpack.c.l.b16 %v1668
        %v1708 = vunpack.c.l.b16 %v1669
        %v1709 = vpack.c.b16 %v1694, %v1693
        %v1710 = vpack.c.b16 %v1696, %v1695
        %v1711 = vpack.c.b16 %v1698, %v1697
        %v1712 = vpack.c.b16 %v1700, %v1699
        %v1713 = vpack.c.b16 %v1702, %v1701
        %v1714 = vpack.c.b16 %v1704, %v1703
        %v1715 = vpack.c.b16 %v1706, %v1705
        %v1716 = vpack.c.b16 %v1708, %v1707
        %1725 = vmatprep.subr.bf16.mxu0 0
        %1726 = vmatpush1.bf16.msra.mxu0 %v1709
        %1727 = vmatprep.subr.bf16.mxu0 0
        %1728 = vmatpush1.bf16.msra.mxu0 %v1710
        %1729 = vmatprep.subr.bf16.mxu0 0
        %1730 = vmatpush1.bf16.msra.mxu0 %v1711
        %1731 = vmatprep.subr.bf16.mxu0 0
        %1732 = vmatpush1.bf16.msra.mxu0 %v1712
        %1733 = vmatprep.subr.bf16.mxu0 0
        %1734 = vmatpush1.bf16.msra.mxu0 %v1713
        %1735 = vmatprep.subr.bf16.mxu0 0
        %1736 = vmatpush1.bf16.msra.mxu0 %v1714
        %1737 = vmatprep.subr.bf16.mxu0 0
        %1738 = vmatpush1.bf16.msra.mxu0 %v1715
        %1739 = vmatprep.subr.bf16.mxu0 0
        %1740 = vmatpush1.bf16.msra.mxu0 %v1716
        %1741 = vmatprep.subr.bf16.mxu0 0
        %1742 = vmatpush1.bf16.msra.mxu0 0
        %1743 = vmatprep.subr.bf16.mxu0 0
        %1744 = vmatpush1.bf16.msra.mxu0 0
        %1745 = vmatprep.subr.bf16.mxu0 0
        %1746 = vmatpush1.bf16.msra.mxu0 0
        %1747 = vmatprep.subr.bf16.mxu0 0
        %1748 = vmatpush1.bf16.msra.mxu0 0
        %1749 = vmatprep.subr.bf16.mxu0 0
        %1750 = vmatpush1.bf16.msra.mxu0 0
        %1751 = vmatprep.subr.bf16.mxu0 0
        %1752 = vmatpush1.bf16.msra.mxu0 0
        %1753 = vmatprep.subr.bf16.mxu0 0
        %1754 = vmatpush1.bf16.msra.mxu0 0
        %1755 = vmatprep.subr.bf16.mxu0 0
        %1756 = vmatpush1.bf16.msra.mxu0 0
        %1757 = vmatprep.mubr.bf16.mxu0 0
        %1758 = vmatmul.mubr.bf16.gmra.mrb[0].mxu0 %v1650
        %v1759 = vpop.f32.mrb[0].mxu0
        %v1760 = vadd.f32 %v1675, %v1759
        %v1761 = vpop.f32.mrb[0].mxu0
        %v1762 = vpop.f32.mrb[0].mxu0
        %v1763 = vadd.f32 %v1675, %v1762
        %v1764 = vpop.f32.mrb[0].mxu0
        %1765 = vmatprep.mubr.bf16.mxu0 0
        %1766 = vmatmul.mubr.bf16.gmra.mrb[0].mxu0 %v1651
        %v1767 = vpop.f32.mrb[0].mxu0
        %v1768 = vadd.f32 %v1675, %v1767
        %v1769 = vpop.f32.mrb[0].mxu0
        %v1770 = vpop.f32.mrb[0].mxu0
        %v1771 = vadd.f32 %v1675, %v1770
        %v1772 = vpop.f32.mrb[0].mxu0
        %1773 = vmatprep.mubr.bf16.mxu0 0
        %1774 = vmatmul.mubr.bf16.gmra.mrb[0].mxu0 %v1652
        %v1775 = vpop.f32.mrb[0].mxu0
        %v1776 = vadd.f32 %v1675, %v1775
        %v1777 = vpop.f32.mrb[0].mxu0
        %v1778 = vpop.f32.mrb[0].mxu0
        %v1779 = vadd.f32 %v1675, %v1778
        %v1780 = vpop.f32.mrb[0].mxu0
        %1781 = vmatprep.mubr.bf16.mxu0 0
        %1782 = vmatmul.mubr.bf16.gmra.mrb[0].mxu0 %v1653
        %v1783 = vpop.f32.mrb[0].mxu0
        %v1784 = vadd.f32 %v1675, %v1783
        %v1785 = vpop.f32.mrb[0].mxu0
        %v1786 = vpop.f32.mrb[0].mxu0
        %v1787 = vadd.f32 %v1675, %v1786
        %v1788 = vpop.f32.mrb[0].mxu0
        %1789 = vdwg.mxu0
        %1790 = vst [vmem:[%s362] sm:$0xff] %v1760
        %1791 = vst [vmem:[%s362 + $0x8] sm:$0xff] %v1763
        %1792 = vst [vmem:[%s362 + $0x10] sm:$0xff] %v1768
        %1793 = vst [vmem:[%s362 + $0x18] sm:$0xff] %v1771
        %1794 = vst [vmem:[%s362 + $0x20] sm:$0xff] %v1776
        %1795 = vst [vmem:[%s362 + $0x28] sm:$0xff] %v1779
        %1796 = vst [vmem:[%s362 + $0x30] sm:$0xff] %v1784
        %1797 = vst [vmem:[%s362 + $0x38] sm:$0xff] %v1787
        %s1798 = sand.u32 %s231, 1
        %s1799 = scalar_lea.sflag [#allocation3], %s1798
        %s1800 = sand.u32 %s231, 1
        %s1801 = smul.addr %s1800, 64
        %s1802 = scalar_lea.vmem [#allocation2], %s1801
        // Predicated region
        $region53: #{tpu_custom_call.1} parent=51 // pred_check
          %p1803 = pneg %p241
        $region54: #{tpu_custom_call.1} parent=51 // pred_check_branch
          %1805 = sbr.rel (%p1803) target = $region56
        $region55: #{tpu_custom_call.1} parent=51 // pred_region
          %s1806 = smul.u32 8, %s27
          %s1808 = ssub.s32 1024, 1024
          %1809 = vsyncadd %s1799, %s1808
          %s1810 = smul.addr %s26, 8
          %s1811 = sadd.s32 %s1806, %s1810
          %s1812 = smul.addr %s1811, 128
          %s1813 = scalar_lea.hbm %s8, %s1812
          %s1814 = sshll.u32 %s1802, 4
          %s1815 = int_to_ptr.vmem [resolvable:$true] %s1814
          %1820 = dma.vmem_to_hbm [thread:$0]  %s1815, 1024, %s1813, %s1799, 128, 128, 8
        $region56: #{tpu_custom_call.1} parent=51 // pred_fallthru
          _
      $region52: #{tpu_custom_call.1} parent=5 // pred_fallthru
        _
      %p1821 = scmp.le.s32.totalorder 2, %s17
      // Predicated region
      $region57: #{tpu_custom_call.1} parent=5 // pred_check
        %p1822 = pneg %p1821
      $region58: #{tpu_custom_call.1} parent=5 // pred_check_branch
        %1824 = sbr.rel (%p1822) target = $region60
      $region59: #{tpu_custom_call.1} parent=5 // pred_region
        %s1825 = ssub.s32 %s17, 2
        // Predicated region
        $region61: #{tpu_custom_call.1} parent=59 // pred_check
          %p1826 = pneg %p247
        $region62: #{tpu_custom_call.1} parent=59 // pred_check_branch
          %1828 = sbr.rel (%p1826) target = $region64
        $region63: #{tpu_custom_call.1} parent=59 // pred_region
          %s1829 = sand.u32 %s232, 1
          %s1830 = scalar_lea.sflag [#allocation3], %s1829
          %s1831 = sand.u32 %s232, 1
          %s1832 = smul.addr %s1831, 64
          %s1833 = scalar_lea.vmem [#allocation2], %s1832
          %1834 = dma.done %s1830, 1024
        $region64: #{tpu_custom_call.1} parent=59 // pred_fallthru
          _
      $region60: #{tpu_custom_call.1} parent=5 // pred_fallthru
        _
    $region6: #{tpu_custom_call.1} parent=1 // loop_footer
      %s21 = sadd.s32 1, %s17
    $region7: #{tpu_custom_call.1} parent=1 // loop_footer_branch
      %16 = sbr.rel target = $region3
    $region8: #{tpu_custom_call.1} parent=1 // loop_exit
      _
    %1835 = vsyncpa [#allocation3], 1
    %s1836 = scalar_lea.sflag [#allocation3], 1
    %1837 = vsyncpa %s1836, 1

</llo_original>
